<compile_context>
chip_gen: v5e
topology: v5e:2x2
jax: 0.10.0
libtpu: 0.0.40
codegen_flags: <defaults>
</compile_context>

<pallas_src>
import math
from functools import partial

import jax
import jax.numpy as jnp
from jax.experimental import pallas as pl
from jax.experimental.pallas import tpu as pltpu

EPS = 1e-5


def _round_up(x, m):
    return (x + m - 1) // m * m


def _vmem_limit_bytes():
    """Generation-aware scoped-VMEM budget: physical capacity minus 16 MiB headroom."""
    cap = 64 * 1024 * 1024                      # conservative fallback (v7x physical)
    try:
        info = pltpu.get_tpu_info()
        cap = int(getattr(info, "vmem_capacity_bytes", cap))
    except Exception:
        pass
    return int(max(cap - 16 * 1024 * 1024, 32 * 1024 * 1024))


VMEM_LIMIT = _vmem_limit_bytes()


def _layernorm(y, gamma, beta):
    """f32 LayerNorm over the last axis."""
    mu = jnp.mean(y, axis=-1, keepdims=True)
    var = jnp.mean((y - mu) ** 2, axis=-1, keepdims=True)
    return (y - mu) * jax.lax.rsqrt(var + EPS) * gamma + beta


# ------------- Kernel 1: fused VisualEmbedding (feat LN + pos LN + order emb) ------
def embed_kernel(feat_ref, pos_ref, ord_ref,
                 fw_ref, fb_ref, fg_ref, fbt_ref,
                 pw_ref, pb_ref, pg_ref, pbt_ref,
                 o_ref):
    # feat Linear(2048->D) + LayerNorm : feats cast to bf16 IN the kernel,
    # f32 accumulation / LN.
    yf = jnp.dot(feat_ref[0].astype(jnp.bfloat16), fw_ref[...],
                 preferred_element_type=jnp.float32) + fb_ref[...]
    yf = _layernorm(yf, fg_ref[...], fbt_ref[...])
    # pos Linear(5->D) + LayerNorm : tiny contraction (K=5), f32, free filler.
    yp = jnp.dot(pos_ref[0], pw_ref[...],
                 preferred_element_type=jnp.float32) + pb_ref[...]
    yp = _layernorm(yp, pg_ref[...], pbt_ref[...])
    # + img order embedding + obj order embedding (pre-gathered per position)
    o_ref[0] = yf + yp + ord_ref[...]


def visual_embedding_fwd(p, feats, pos, vocab_size):
    """feats: [B, N, 2048] f32   pos: [B, N, 4]  ->  [B, N, D] f32"""
    B, N, F = feats.shape
    D = p["feat_w"].shape[1]

    # area from boxes (x1, x2, y1, y2) per reference docstring; pos5 = [pos, area]
    height = pos[:, :, 3] - pos[:, :, 2]
    width = pos[:, :, 1] - pos[:, :, 0]
    area = (height * width)[..., None]
    pos5 = jnp.concatenate([pos, area], axis=2).astype(jnp.float32)          # [B,N,5]

    # order embeddings (tiny gathers; summed into [N, D], added inside the kernel)
    obj_ids = vocab_size - jnp.arange(N, dtype=jnp.int32) - 1
    order_add = p["img_order_emb"][0][None, :] + p["obj_order_emb"][obj_ids]  # [N, D]

    # pad rows to a multiple of 16 (bf16 sublane packing) and pick a large row tile
    Np = _round_up(N, 16)
    tn = min(Np, 512)
    Np = _round_up(Np, tn)
    feats_f = feats
    if Np != N:
        feats_f = jnp.pad(feats_f, ((0, 0), (0, Np - N), (0, 0)))
        pos5 = jnp.pad(pos5, ((0, 0), (0, Np - N), (0, 0)))
        order_add = jnp.pad(order_add, ((0, Np - N), (0, 0)))

    cost = pl.CostEstimate(
        flops=2 * B * Np * D * (F + 5),
        transcendentals=2 * B * Np,
        bytes_accessed=int(B * Np * F * 4 + B * Np * 5 * 4 + Np * D * 4
                           + F * D * 2 + 5 * D * 4 + 8 * D * 4 + B * Np * D * 4))

    out = pl.pallas_call(
        embed_kernel,
        out_shape=jax.ShapeDtypeStruct((B, Np, D), jnp.float32),
        grid=(B, Np // tn),
        in_specs=[
            pl.BlockSpec((1, tn, F), lambda b, j: (b, j, 0)),   # feats (f32 in HBM)
            pl.BlockSpec((1, tn, 5), lambda b, j: (b, j, 0)),   # pos+area
            pl.BlockSpec((tn, D), lambda b, j: (j, 0)),         # order embeddings
            pl.BlockSpec((F, D), lambda b, j: (0, 0)),          # feat_w (bf16, resident)
            pl.BlockSpec((1, D), lambda b, j: (0, 0)),          # feat_b
            pl.BlockSpec((1, D), lambda b, j: (0, 0)),          # feat_g
            pl.BlockSpec((1, D), lambda b, j: (0, 0)),          # feat_beta
            pl.BlockSpec((5, D), lambda b, j: (0, 0)),          # pos_w
            pl.BlockSpec((1, D), lambda b, j: (0, 0)),          # pos_b
            pl.BlockSpec((1, D), lambda b, j: (0, 0)),          # pos_g
            pl.BlockSpec((1, D), lambda b, j: (0, 0)),          # pos_beta
        ],
        out_specs=pl.BlockSpec((1, tn, D), lambda b, j: (b, j, 0)),
        compiler_params=pltpu.CompilerParams(
            dimension_semantics=("parallel", "parallel"),
            vmem_limit_bytes=VMEM_LIMIT),
        cost_estimate=cost,
    )(feats_f, pos5, order_add,
      p["feat_w"], p["feat_b"], p["feat_g"], p["feat_beta"],
      p["pos_w"], p["pos_b"], p["pos_g"], p["pos_beta"])
    return out[:, :N]


# -------- Kernel 2: fused post-norm transformer encoder STACK (all layers) ---------
# grid = (B, L): batch is "parallel" (megacore), layers is the inner carried axis.
# x lives in a VMEM scratch across the L axis; only the last layer writes o_ref.
def encoder_stack_kernel(lens_ref,                       # scalar prefetch: [B] int32
                         x_ref,
                         wqkv_ref, bqkv_ref, wo_ref, bo_ref,
                         g1_ref, be1_ref, w1_ref, b1_ref,
                         w2_ref, b2_ref, g2_ref, be2_ref,
                         o_ref, x_scr, *, num_heads, num_layers):
    b = pl.program_id(0)
    l = pl.program_id(1)

    @pl.when(l == 0)
    def _():
        x_scr[...] = x_ref[0]

    x = x_scr[...]                         # [S, D] f32 carry
    S, D = x.shape
    hd = D // num_heads
    scale = 1.0 / math.sqrt(hd)
    xb = x.astype(jnp.bfloat16)

    # additive key-padding mask built from SMEM lengths (no HBM mask array / DMA)
    length = lens_ref[b]
    key_ids = jax.lax.broadcasted_iota(jnp.int32, (1, S), 1)
    mask = jnp.where(key_ids < length, 0.0, -1e9).astype(jnp.float32)   # [1, S]

    # One wide fused QKV projection: [S, D] x [D, 3D] -> [S, 3D] (f32 accumulate).
    qkv = jnp.dot(xb, wqkv_ref[0], preferred_element_type=jnp.float32) + bqkv_ref[0]

    # Per-head attention, unrolled in-kernel (no head grid axis, no per-head DMA).
    ctx_heads = []
    for h in range(num_heads):
        qh = qkv[:, h * hd:(h + 1) * hd].astype(jnp.bfloat16)
        kh = qkv[:, D + h * hd:D + (h + 1) * hd].astype(jnp.bfloat16)
        vh = qkv[:, 2 * D + h * hd:2 * D + (h + 1) * hd].astype(jnp.bfloat16)
        s = jax.lax.dot_general(qh, kh, (((1,), (1,)), ((), ())),
                                preferred_element_type=jnp.float32)      # [S, S]
        s = s * scale + mask
        s = s - jnp.max(s, axis=-1, keepdims=True)
        prob = jnp.exp(s)
        prob = prob / jnp.sum(prob, axis=-1, keepdims=True)              # exact div
        ctx_heads.append(jnp.dot(prob.astype(jnp.bfloat16), vh,
                                 preferred_element_type=jnp.float32))    # [S, hd]
    ctx = jnp.concatenate(ctx_heads, axis=-1)                            # [S, D]

    # Single wide output projection over the concatenated heads.
    attn = jnp.dot(ctx.astype(jnp.bfloat16), wo_ref[0],
                   preferred_element_type=jnp.float32) + bo_ref[0]
    x1 = _layernorm(x + attn, g1_ref[0], be1_ref[0])
    h1 = jnp.dot(x1.astype(jnp.bfloat16), w1_ref[0],
                 preferred_element_type=jnp.float32) + b1_ref[0]
    h1 = jnp.maximum(h1, 0.0)                                            # ReLU
    h2 = jnp.dot(h1.astype(jnp.bfloat16), w2_ref[0],
                 preferred_element_type=jnp.float32) + b2_ref[0]
    y = _layernorm(x1 + h2, g2_ref[0], be2_ref[0])

    x_scr[...] = y                        # carry to next layer

    @pl.when(l == num_layers - 1)
    def _():
        o_ref[0] = y


def encoder_stack(x, lengths, sp, num_heads):
    """x: [B, Sp, D] f32   lengths: [B] int32   sp: stacked layer params."""
    B, Sp, D = x.shape
    L = sp["wqkv"].shape[0]
    FF = sp["w1"].shape[2]
    D3 = 3 * D

    def lspec(r, c):
        return pl.BlockSpec((1, r, c), lambda bi, li, lens: (li, 0, 0))

    cost = pl.CostEstimate(
        flops=B * L * (8 * Sp * D * D + 4 * Sp * Sp * D + 4 * Sp * D * FF),
        transcendentals=B * L * (num_heads * Sp * Sp + 4 * Sp),
        bytes_accessed=int(2 * B * Sp * D * 4
                           + L * (4 * D * D + 2 * D * FF) * 2
                           + L * (4 * D + 2 * FF + 7 * D) * 4 + B * 4))

    # NOTE(v7x): if B == 1 in production, split the query rows onto an extra
    # "parallel" grid axis so both TensorCores are used.
    return pl.pallas_call(
        partial(encoder_stack_kernel, num_heads=num_heads, num_layers=L),
        out_shape=jax.ShapeDtypeStruct((B, Sp, D), jnp.float32),
        grid_spec=pltpu.PrefetchScalarGridSpec(
            num_scalar_prefetch=1,
            grid=(B, L),
            in_specs=[
                pl.BlockSpec((1, Sp, D), lambda bi, li, lens: (bi, 0, 0)),  # x
                lspec(D, D3), lspec(1, D3),      # wqkv, bqkv
                lspec(D, D), lspec(1, D),        # wo, bo
                lspec(1, D), lspec(1, D),        # g1, be1
                lspec(D, FF), lspec(1, FF),      # w1, b1
                lspec(FF, D), lspec(1, D),       # w2, b2
                lspec(1, D), lspec(1, D),        # g2, be2
            ],
            out_specs=pl.BlockSpec((1, Sp, D), lambda bi, li, lens: (bi, 0, 0)),
            scratch_shapes=[pltpu.VMEM((Sp, D), jnp.float32)]),
        compiler_params=pltpu.CompilerParams(
            dimension_semantics=("parallel", "arbitrary"),
            vmem_limit_bytes=VMEM_LIMIT),
        cost_estimate=cost,
    )(lengths, x,
      sp["wqkv"], sp["bqkv"], sp["wo"], sp["bo"],
      sp["g1"], sp["be1"], sp["w1"], sp["b1"],
      sp["w2"], sp["b2"], sp["g2"], sp["be2"])


# --------------------------------- parameters --------------------------------------
def _linear_init(key, fan_in, fan_out):
    kw, kb = jax.random.split(key)
    w = jax.random.normal(kw, (fan_in, fan_out), jnp.float32) * 0.02
    b = jax.random.normal(kb, (1, fan_out), jnp.float32) * 0.02
    return w, b


def init_params(key, d_model, num_layers, ff_dim, feat_dim, vocab_size, num_heads):
    D = d_model
    keys = jax.random.split(key, 5 + num_layers)
    p = {}
    # VisualEmbedding: feat Linear+LN, pos Linear+LN, order embeddings
    fw, p["feat_b"] = _linear_init(keys[0], feat_dim, D)
    p["feat_w"] = fw.astype(jnp.bfloat16)     # bf16 MXU operand (f32 accumulate)
    p["feat_g"] = jnp.ones((1, D), jnp.float32)
    p["feat_beta"] = jnp.zeros((1, D), jnp.float32)
    p["pos_w"], p["pos_b"] = _linear_init(keys[1], 5, D)
    p["pos_g"] = jnp.ones((1, D), jnp.float32)
    p["pos_beta"] = jnp.zeros((1, D), jnp.float32)
    p["img_order_emb"] = jax.random.normal(keys[2], (1, D), jnp.float32) * 0.02
    p["obj_order_emb"] = jax.random.normal(keys[3], (vocab_size, D), jnp.float32) * 0.02
    p["cls"] = jax.random.normal(keys[4], (D,), jnp.float32)

    # ImageTransformerEncoder layers, stacked along a leading L axis.
    wqkv, bqkv, wo, bo, w1, b1, w2, b2 = [], [], [], [], [], [], [], []
    for l in range(num_layers):
        lk = jax.random.split(keys[5 + l], 4)
        w_qkv, b_qkv = _linear_init(lk[0], D, 3 * D)
        w_o, b_o = _linear_init(lk[1], D, D)
        w_1, b_1 = _linear_init(lk[2], D, ff_dim)
        w_2, b_2 = _linear_init(lk[3], ff_dim, D)
        wqkv.append(w_qkv.astype(jnp.bfloat16)); bqkv.append(b_qkv)
        wo.append(w_o.astype(jnp.bfloat16));     bo.append(b_o)
        w1.append(w_1.astype(jnp.bfloat16));     b1.append(b_1)
        w2.append(w_2.astype(jnp.bfloat16));     b2.append(b_2)
    L = num_layers
    p["layers"] = dict(
        wqkv=jnp.stack(wqkv), bqkv=jnp.stack(bqkv),        # [L,D,3D], [L,1,3D]
        wo=jnp.stack(wo), bo=jnp.stack(bo),                # [L,D,D],  [L,1,D]
        g1=jnp.ones((L, 1, D), jnp.float32), be1=jnp.zeros((L, 1, D), jnp.float32),
        w1=jnp.stack(w1), b1=jnp.stack(b1),                # [L,D,FF], [L,1,FF]
        w2=jnp.stack(w2), b2=jnp.stack(b2),                # [L,FF,D], [L,1,D]
        g2=jnp.ones((L, 1, D), jnp.float32), be2=jnp.zeros((L, 1, D), jnp.float32))
    return p


# --------------------------------- forward pass ------------------------------------
def visual_encoder_fwd(p, vis_feats, boxes, img_len, *, num_heads, vocab_size):
    vis_embeds = visual_embedding_fwd(p, vis_feats, boxes, vocab_size)    # [B, N, D]
    B, N, D = vis_embeds.shape
    cls = jnp.broadcast_to(p["cls"][None, None, :], (B, 1, D))
    x = jnp.concatenate([cls, vis_embeds], axis=1)                        # [B, N+1, D]
    S = N + 1
    Sp = _round_up(S, 16)             # 16-align the sequence (bf16 sublane packing)
    if Sp != S:
        x = jnp.pad(x, ((0, 0), (0, Sp - S), (0, 0)))
    lengths = jnp.asarray(img_len, jnp.int32) + 1                         # +1 for CLS
    x = encoder_stack(x, lengths, p["layers"], num_heads)                 # [B, Sp, D]
    x = x[:, :S]
    return x[:, 0], x[:, 1:]


# ------------------------------------- main -----------------------------------------
if __name__ == "__main__":
    B, N = 2, 8
    d_model = 128           # config.d_model (small, lane-aligned, for the demo)
    feat_dim = 2048         # hardcoded in the module
    ff_dim = 2048           # hardcoded dim_feedforward
    num_layers = 4          # hardcoded
    num_heads = 8           # hardcoded
    vocab_size = 100        # synthetic obj_order_embedding table

    key = jax.random.PRNGKey(0)
    k_feat, k_box, k_par = jax.random.split(key, 3)
    vis_feats = jax.random.normal(k_feat, (B, N, feat_dim), jnp.float32)
    boxes = jax.random.uniform(k_box, (B, N, 4), jnp.float32)
    img_len = [8, 6]

    params = init_params(k_par, d_model, num_layers, ff_dim, feat_dim,
                         vocab_size, num_heads)

    cls_out, seq_out = visual_encoder_fwd(
        params, vis_feats, boxes, img_len, num_heads=num_heads, vocab_size=vocab_size)

    jax.block_until_ready(cls_out)
    jax.block_until_ready(seq_out)
    assert cls_out.shape == (B, d_model)
    assert seq_out.shape == (B, N, d_model)
    print("KERNEL_OK")
</pallas_src>

<mosaic_0001>
module attributes {stable_mosaic.version = 11 : i64} {
  func.func @embed_kernel(%arg0: i32, %arg1: i32, %arg2: memref<1x16x2048xf32, #tpu.memory_space<vmem>>, %arg3: memref<1x16x5xf32, #tpu.memory_space<vmem>>, %arg4: memref<16x128xf32, #tpu.memory_space<vmem>>, %arg5: memref<2048x128xbf16, #tpu.memory_space<vmem>>, %arg6: memref<1x128xf32, #tpu.memory_space<vmem>>, %arg7: memref<1x128xf32, #tpu.memory_space<vmem>>, %arg8: memref<1x128xf32, #tpu.memory_space<vmem>>, %arg9: memref<5x128xf32, #tpu.memory_space<vmem>>, %arg10: memref<1x128xf32, #tpu.memory_space<vmem>>, %arg11: memref<1x128xf32, #tpu.memory_space<vmem>>, %arg12: memref<1x128xf32, #tpu.memory_space<vmem>>, %arg13: memref<1x16x128xf32, #tpu.memory_space<vmem>>) attributes {dimension_semantics = [#tpu.dimension_semantics<parallel>, #tpu.dimension_semantics<parallel>], iteration_bounds = array<i64: 2, 1>, scalar_prefetch = 0 : i64, scratch_operands = 0 : i64, tpu.core_type = #tpu.core_type<tc>, window_params = [{transform_indices = @transform_0, window_bounds = array<i64: 1, 16, 2048>}, {transform_indices = @transform_1, window_bounds = array<i64: 1, 16, 5>}, {transform_indices = @transform_2, window_bounds = array<i64: 16, 128>}, {pipeline_mode = #tpu.pipeline_mode<synchronous>, transform_indices = @transform_3, window_bounds = array<i64: 2048, 128>}, {pipeline_mode = #tpu.pipeline_mode<synchronous>, transform_indices = @transform_4, window_bounds = array<i64: 1, 128>}, {pipeline_mode = #tpu.pipeline_mode<synchronous>, transform_indices = @transform_5, window_bounds = array<i64: 1, 128>}, {pipeline_mode = #tpu.pipeline_mode<synchronous>, transform_indices = @transform_6, window_bounds = array<i64: 1, 128>}, {pipeline_mode = #tpu.pipeline_mode<synchronous>, transform_indices = @transform_7, window_bounds = array<i64: 5, 128>}, {pipeline_mode = #tpu.pipeline_mode<synchronous>, transform_indices = @transform_8, window_bounds = array<i64: 1, 128>}, {pipeline_mode = #tpu.pipeline_mode<synchronous>, transform_indices = @transform_9, window_bounds = array<i64: 1, 128>}, {pipeline_mode = #tpu.pipeline_mode<synchronous>, transform_indices = @transform_10, window_bounds = array<i64: 1, 128>}, {transform_indices = @transform_11, window_bounds = array<i64: 1, 16, 128>}]} {
    %c0 = arith.constant 0 : index
    %c0_0 = arith.constant 0 : index
    %c0_1 = arith.constant 0 : index
    %0 = vector.load %arg2[%c0, %c0_0, %c0_1] : memref<1x16x2048xf32, #tpu.memory_space<vmem>>, vector<1x16x2048xf32>
    %1 = vector.shape_cast %0 : vector<1x16x2048xf32> to vector<16x2048xf32>
    %2 = arith.truncf %1 : vector<16x2048xf32> to vector<16x2048xbf16>
    %c0_2 = arith.constant 0 : index
    %c0_3 = arith.constant 0 : index
    %3 = vector.load %arg5[%c0_2, %c0_3] : memref<2048x128xbf16, #tpu.memory_space<vmem>>, vector<2048x128xbf16>
    %cst = arith.constant dense<0.000000e+00> : vector<16x128xf32>
    %4 = tpu.matmul %2, %3, %cst {dimension_numbers = #tpu.dot_dimension_numbers<[1], [0], [0], [1], [0, 0, 1, 1], [], []>} : vector<16x2048xbf16>, vector<2048x128xbf16>, vector<16x128xf32> -> vector<16x128xf32>
    %c0_4 = arith.constant 0 : index
    %c0_5 = arith.constant 0 : index
    %5 = vector.load %arg6[%c0_4, %c0_5] : memref<1x128xf32, #tpu.memory_space<vmem>>, vector<1x128xf32>
    %6 = vector.broadcast %5 : vector<1x128xf32> to vector<16x128xf32>
    %7 = arith.addf %4, %6 : vector<16x128xf32>
    %c0_6 = arith.constant 0 : index
    %c0_7 = arith.constant 0 : index
    %8 = vector.load %arg7[%c0_6, %c0_7] : memref<1x128xf32, #tpu.memory_space<vmem>>, vector<1x128xf32>
    %c0_8 = arith.constant 0 : index
    %c0_9 = arith.constant 0 : index
    %9 = vector.load %arg8[%c0_8, %c0_9] : memref<1x128xf32, #tpu.memory_space<vmem>>, vector<1x128xf32>
    %cst_10 = arith.constant dense<0.000000e+00> : vector<16xf32>
    %10 = vector.multi_reduction <add>, %7, %cst_10 [1] : vector<16x128xf32> to vector<16xf32>
    %11 = vector.shape_cast %10 : vector<16xf32> to vector<16x1xf32>
    %cst_11 = arith.constant 1.280000e+02 : f32
    %12 = vector.broadcast %cst_11 : f32 to vector<16x1xf32>
    %13 = arith.divf %11, %12 : vector<16x1xf32>
    %14 = vector.broadcast %13 : vector<16x1xf32> to vector<16x128xf32>
    %15 = arith.subf %7, %14 : vector<16x128xf32>
    %16 = arith.mulf %15, %15 : vector<16x128xf32>
    %cst_12 = arith.constant dense<0.000000e+00> : vector<16xf32>
    %17 = vector.multi_reduction <add>, %16, %cst_12 [1] : vector<16x128xf32> to vector<16xf32>
    %18 = vector.shape_cast %17 : vector<16xf32> to vector<16x1xf32>
    %cst_13 = arith.constant 1.280000e+02 : f32
    %19 = vector.broadcast %cst_13 : f32 to vector<16x1xf32>
    %20 = arith.divf %18, %19 : vector<16x1xf32>
    %21 = vector.broadcast %13 : vector<16x1xf32> to vector<16x128xf32>
    %22 = arith.subf %7, %21 : vector<16x128xf32>
    %cst_14 = arith.constant 9.99999974E-6 : f32
    %23 = vector.broadcast %cst_14 : f32 to vector<16x1xf32>
    %24 = arith.addf %20, %23 : vector<16x1xf32>
    %25 = math.rsqrt %24 : vector<16x1xf32>
    %26 = vector.broadcast %25 : vector<16x1xf32> to vector<16x128xf32>
    %27 = arith.mulf %22, %26 : vector<16x128xf32>
    %28 = vector.broadcast %8 : vector<1x128xf32> to vector<16x128xf32>
    %29 = arith.mulf %27, %28 : vector<16x128xf32>
    %30 = vector.broadcast %9 : vector<1x128xf32> to vector<16x128xf32>
    %31 = arith.addf %29, %30 : vector<16x128xf32>
    %c0_15 = arith.constant 0 : index
    %c0_16 = arith.constant 0 : index
    %c0_17 = arith.constant 0 : index
    %32 = vector.load %arg3[%c0_15, %c0_16, %c0_17] : memref<1x16x5xf32, #tpu.memory_space<vmem>>, vector<1x16x5xf32>
    %33 = vector.shape_cast %32 : vector<1x16x5xf32> to vector<16x5xf32>
    %c0_18 = arith.constant 0 : index
    %c0_19 = arith.constant 0 : index
    %34 = vector.load %arg9[%c0_18, %c0_19] : memref<5x128xf32, #tpu.memory_space<vmem>>, vector<5x128xf32>
    %cst_20 = arith.constant dense<0.000000e+00> : vector<16x128xf32>
    %35 = tpu.matmul %33, %34, %cst_20 {dimension_numbers = #tpu.dot_dimension_numbers<[1], [0], [0], [1], [0, 0, 1, 1], [], []>} : vector<16x5xf32>, vector<5x128xf32>, vector<16x128xf32> -> vector<16x128xf32>
    %c0_21 = arith.constant 0 : index
    %c0_22 = arith.constant 0 : index
    %36 = vector.load %arg10[%c0_21, %c0_22] : memref<1x128xf32, #tpu.memory_space<vmem>>, vector<1x128xf32>
    %37 = vector.broadcast %36 : vector<1x128xf32> to vector<16x128xf32>
    %38 = arith.addf %35, %37 : vector<16x128xf32>
    %c0_23 = arith.constant 0 : index
    %c0_24 = arith.constant 0 : index
    %39 = vector.load %arg11[%c0_23, %c0_24] : memref<1x128xf32, #tpu.memory_space<vmem>>, vector<1x128xf32>
    %c0_25 = arith.constant 0 : index
    %c0_26 = arith.constant 0 : index
    %40 = vector.load %arg12[%c0_25, %c0_26] : memref<1x128xf32, #tpu.memory_space<vmem>>, vector<1x128xf32>
    %cst_27 = arith.constant dense<0.000000e+00> : vector<16xf32>
    %41 = vector.multi_reduction <add>, %38, %cst_27 [1] : vector<16x128xf32> to vector<16xf32>
    %42 = vector.shape_cast %41 : vector<16xf32> to vector<16x1xf32>
    %cst_28 = arith.constant 1.280000e+02 : f32
    %43 = vector.broadcast %cst_28 : f32 to vector<16x1xf32>
    %44 = arith.divf %42, %43 : vector<16x1xf32>
    %45 = vector.broadcast %44 : vector<16x1xf32> to vector<16x128xf32>
    %46 = arith.subf %38, %45 : vector<16x128xf32>
    %47 = arith.mulf %46, %46 : vector<16x128xf32>
    %cst_29 = arith.constant dense<0.000000e+00> : vector<16xf32>
    %48 = vector.multi_reduction <add>, %47, %cst_29 [1] : vector<16x128xf32> to vector<16xf32>
    %49 = vector.shape_cast %48 : vector<16xf32> to vector<16x1xf32>
    %cst_30 = arith.constant 1.280000e+02 : f32
    %50 = vector.broadcast %cst_30 : f32 to vector<16x1xf32>
    %51 = arith.divf %49, %50 : vector<16x1xf32>
    %52 = vector.broadcast %44 : vector<16x1xf32> to vector<16x128xf32>
    %53 = arith.subf %38, %52 : vector<16x128xf32>
    %cst_31 = arith.constant 9.99999974E-6 : f32
    %54 = vector.broadcast %cst_31 : f32 to vector<16x1xf32>
    %55 = arith.addf %51, %54 : vector<16x1xf32>
    %56 = math.rsqrt %55 : vector<16x1xf32>
    %57 = vector.broadcast %56 : vector<16x1xf32> to vector<16x128xf32>
    %58 = arith.mulf %53, %57 : vector<16x128xf32>
    %59 = vector.broadcast %39 : vector<1x128xf32> to vector<16x128xf32>
    %60 = arith.mulf %58, %59 : vector<16x128xf32>
    %61 = vector.broadcast %40 : vector<1x128xf32> to vector<16x128xf32>
    %62 = arith.addf %60, %61 : vector<16x128xf32>
    %63 = arith.addf %31, %62 : vector<16x128xf32>
    %c0_32 = arith.constant 0 : index
    %c0_33 = arith.constant 0 : index
    %64 = vector.load %arg4[%c0_32, %c0_33] : memref<16x128xf32, #tpu.memory_space<vmem>>, vector<16x128xf32>
    %65 = arith.addf %63, %64 : vector<16x128xf32>
    %c0_34 = arith.constant 0 : index
    %c0_35 = arith.constant 0 : index
    %c0_36 = arith.constant 0 : index
    %66 = vector.load %arg13[%c0_34, %c0_35, %c0_36] : memref<1x16x128xf32, #tpu.memory_space<vmem>>, vector<1x16x128xf32>
    %67 = vector.shape_cast %66 : vector<1x16x128xf32> to vector<16x128xf32>
    %68 = vector.shape_cast %65 : vector<16x128xf32> to vector<1x16x128xf32>
    tpu.vector_store %arg13[%c0_34, %c0_35, %c0_36], %68 {strides = array<i32>} : memref<1x16x128xf32, #tpu.memory_space<vmem>>, vector<1x16x128xf32>,
    return
  }
  func.func @transform_0(%arg0: i32, %arg1: i32) -> (i32, i32, i32) {
    %c0_i32 = arith.constant 0 : i32
    %c0_i32_0 = arith.constant 0 : i32
    return %arg0, %arg1, %c0_i32 : i32, i32, i32
  }
  func.func @transform_1(%arg0: i32, %arg1: i32) -> (i32, i32, i32) {
    %c0_i32 = arith.constant 0 : i32
    %c0_i32_0 = arith.constant 0 : i32
    return %arg0, %arg1, %c0_i32 : i32, i32, i32
  }
  func.func @transform_2(%arg0: i32, %arg1: i32) -> (i32, i32) {
    %c0_i32 = arith.constant 0 : i32
    %c0_i32_0 = arith.constant 0 : i32
    return %arg1, %c0_i32 : i32, i32
  }
  func.func @transform_3(%arg0: i32, %arg1: i32) -> (i32, i32) {
    %c0_i32 = arith.constant 0 : i32
    %c0_i32_0 = arith.constant 0 : i32
    %c0_i32_1 = arith.constant 0 : i32
    return %c0_i32, %c0_i32_0 : i32, i32
  }
  func.func @transform_4(%arg0: i32, %arg1: i32) -> (i32, i32) {
    %c0_i32 = arith.constant 0 : i32
    %c0_i32_0 = arith.constant 0 : i32
    %c0_i32_1 = arith.constant 0 : i32
    return %c0_i32, %c0_i32_0 : i32, i32
  }
  func.func @transform_5(%arg0: i32, %arg1: i32) -> (i32, i32) {
    %c0_i32 = arith.constant 0 : i32
    %c0_i32_0 = arith.constant 0 : i32
    %c0_i32_1 = arith.constant 0 : i32
    return %c0_i32, %c0_i32_0 : i32, i32
  }
  func.func @transform_6(%arg0: i32, %arg1: i32) -> (i32, i32) {
    %c0_i32 = arith.constant 0 : i32
    %c0_i32_0 = arith.constant 0 : i32
    %c0_i32_1 = arith.constant 0 : i32
    return %c0_i32, %c0_i32_0 : i32, i32
  }
  func.func @transform_7(%arg0: i32, %arg1: i32) -> (i32, i32) {
    %c0_i32 = arith.constant 0 : i32
    %c0_i32_0 = arith.constant 0 : i32
    %c0_i32_1 = arith.constant 0 : i32
    return %c0_i32, %c0_i32_0 : i32, i32
  }
  func.func @transform_8(%arg0: i32, %arg1: i32) -> (i32, i32) {
    %c0_i32 = arith.constant 0 : i32
    %c0_i32_0 = arith.constant 0 : i32
    %c0_i32_1 = arith.constant 0 : i32
    return %c0_i32, %c0_i32_0 : i32, i32
  }
  func.func @transform_9(%arg0: i32, %arg1: i32) -> (i32, i32) {
    %c0_i32 = arith.constant 0 : i32
    %c0_i32_0 = arith.constant 0 : i32
    %c0_i32_1 = arith.constant 0 : i32
    return %c0_i32, %c0_i32_0 : i32, i32
  }
  func.func @transform_10(%arg0: i32, %arg1: i32) -> (i32, i32) {
    %c0_i32 = arith.constant 0 : i32
    %c0_i32_0 = arith.constant 0 : i32
    %c0_i32_1 = arith.constant 0 : i32
    return %c0_i32, %c0_i32_0 : i32, i32
  }
  func.func @transform_11(%arg0: i32, %arg1: i32) -> (i32, i32, i32) {
    %c0_i32 = arith.constant 0 : i32
    %c0_i32_0 = arith.constant 0 : i32
    return %arg0, %arg1, %c0_i32 : i32, i32, i32
  }
}

</mosaic_0001>

<llo_original>
// kernel: tpu_custom_call.1
$region0: #{tpu_custom_call.1}
  #allocation0 [shape = 'u32[]', space=smem, size = 0x4, offset = 0x4, fixed_abs, tag = 'smem constant byte address 0x4 - core index']
  #allocation1 [shape = 'u32[72,128]{1,0:T(1,128)}', space=vmem, size = 0x9000, scoped, tag = 'internal scratch']
  %s0 = inlined_call_operand.hbm [shape: f32[2,16,2048], index: 0, kind: input, shape index: {}]
  %s1 = inlined_call_operand.vmem [shape: f32[2,16,5], index: 1, kind: input, shape index: {}]
  %s2 = inlined_call_operand.vmem [shape: f32[16,128], index: 2, kind: input, shape index: {}]
  %s3 = inlined_call_operand.hbm [shape: bf16[2048,128], index: 3, kind: input, shape index: {}]
  %s4 = inlined_call_operand.vmem [shape: f32[1,128], index: 4, kind: input, shape index: {}]
  %s5 = inlined_call_operand.vmem [shape: f32[1,128], index: 5, kind: input, shape index: {}]
  %s6 = inlined_call_operand.vmem [shape: f32[1,128], index: 6, kind: input, shape index: {}]
  %s7 = inlined_call_operand.vmem [shape: f32[5,128], index: 7, kind: input, shape index: {}]
  %s8 = inlined_call_operand.vmem [shape: f32[1,128], index: 8, kind: input, shape index: {}]
  %s9 = inlined_call_operand.vmem [shape: f32[1,128], index: 9, kind: input, shape index: {}]
  %s10 = inlined_call_operand.vmem [shape: f32[1,128], index: 10, kind: input, shape index: {}]
  %s11 = inlined_call_operand.hbm [shape: f32[2,16,128], index: 11, kind: output, shape index: {}]
  %s12 = sld [smem:[#allocation0]]
  $region85: #{tpu_custom_call.1} parent=0
    _
  %s14 = ssub.s32 1, %s12
  %s15 = scalar_select 0, %s14, %s12
  $region1: #{tpu_custom_call.1} parent=0
    #allocation2 [shape = 'u8[262144]{0}', space=vmem, size = 0x40000, scoped, tag = 'input window, operand 0']
    #allocation3 [shape = 's32[2]{0}', space=sflag, size = 0x8, scoped, tag = 'scoped memory for tpu_custom_call.1']
    #allocation4 [shape = 's32[2]{0}', space=sflag, size = 0x8, scoped, tag = 'scoped memory for tpu_custom_call.1']
    #allocation5 [shape = 'u8[524288]{0}', space=vmem, size = 0x80000, scoped, tag = 'input window, operand 3, single buffered']
    #allocation6 [shape = 's32[1]{0}', space=sflag, size = 0x4, scoped, tag = 'scoped memory for tpu_custom_call.1']
    #allocation7 [shape = 'u8[16384]{0}', space=vmem, size = 0x4000, scoped, tag = 'output window, operand 0']
    %16 = vsyncpa [#allocation3], 0
    %s17 = scalar_lea.sflag [#allocation3], 1
    %18 = vsyncpa %s17, 0
    %19 = vsyncpa [#allocation6], 0
    %20 = vsyncpa [#allocation4], 0
    %s21 = scalar_lea.sflag [#allocation4], 1
    %22 = vsyncpa %s21, 0
    loop: start=0, step=1, limit=4
    $region2: #{tpu_custom_call.1} parent=1 // loop_pre_header
      _
    $region3: #{tpu_custom_call.1} parent=1 // loop_header
      %s24 = sphi 0, %s28
      %p25 = scmp.ge.s32.totalorder %s24, 4
      %s31 = sphi 0, %s43
      %s32 = sphi 0, %s39
      %s33 = sphi 0, %s31
      %s34 = sphi 0, %s32
      %s35 = sphi 0, %s33
      %s36 = sphi 0, %s34
      %s48 = sphi 0, %s50
      %s51 = sphi 0, %s48
      %s52 = sphi 0, %s51
      %s68 = sphi 0, %s52
      %s76 = sphi 0, %s78
      %s79 = sphi 0, %s76
      %s80 = sphi 0, %s79
      %s96 = sphi 0, %s80
      %s102 = sphi 0, %s104
      %s105 = sphi 0, %s102
      %s106 = sphi 0, %s105
      %s122 = sphi 0, %s106
      %s126 = sphi 0, %s126
      %s128 = sphi 0, %s126
      %s129 = sphi 0, %s128
      %s143 = sphi 0, %s129
      %s147 = sphi 0, %s147
      %s149 = sphi 0, %s147
      %s150 = sphi 0, %s149
      %s164 = sphi 0, %s150
      %s168 = sphi 0, %s168
      %s170 = sphi 0, %s168
      %s171 = sphi 0, %s170
      %s185 = sphi 0, %s171
      %s189 = sphi 0, %s189
      %s191 = sphi 0, %s189
      %s192 = sphi 0, %s191
      %s206 = sphi 0, %s192
      %s210 = sphi 0, %s210
      %s212 = sphi 0, %s210
      %s213 = sphi 0, %s212
      %s227 = sphi 0, %s213
      %s231 = sphi 0, %s231
      %s233 = sphi 0, %s231
      %s234 = sphi 0, %s233
      %s248 = sphi 0, %s234
      %s252 = sphi 0, %s252
      %s254 = sphi 0, %s252
      %s255 = sphi 0, %s254
      %s269 = sphi 0, %s255
      %s273 = sphi 0, %s273
      %s275 = sphi 0, %s273
      %s276 = sphi 0, %s275
      %s290 = sphi 0, %s276
      %s298 = sphi 0, %s300
      %s301 = sphi 0, %s298
      %s302 = sphi 0, %s301
      %s318 = sphi 0, %s302
    $region4: #{tpu_custom_call.1} parent=1 // loop_header_branch
      %27 = sbr.rel (%p25) target = $region8
    $region5: #{tpu_custom_call.1} parent=1 // loop_body
      %s29 = ssub.s32 %s24, 1
      %s30 = ssub.s32 %s24, 2
      %s37 = sadd.s32 1, %s32
      %p38 = scmp.ge.s32.totalorder %s37, 1
      %s39 = scalar_select %p38, 0, %s37
      %s40 = sadd.s32 1, %s31
      %s41 = scalar_select %p38, %s40, %s31
      %p42 = scmp.ge.s32.totalorder %s41, 2
      %s43 = scalar_select %p42, 0, %s41
      %s44 = ssub.s32 %s31, %s43
      %s45 = ssub.s32 %s32, %s39
      %s46 = sor.u32 %s44, %s45
      %p47 = scmp.eq.s32.totalorder %s46, 0
      %s49 = sadd.s32 %s48, 1
      %s50 = scalar_select %p47, %s48, %s49
      %p53 = pneg %p47
      %p54 = scmp.eq.s32.totalorder %s24, 1
      %p55 = por %p53, %p54
      %p56 = scmp.ne.s32.totalorder %s48, %s51
      %p57 = scmp.eq.s32.totalorder %s24, 0
      %p58 = por %p56, %p57
      %p59 = scmp.ne.s32.totalorder %s48, %s51
      %p60 = scmp.eq.s32.totalorder %s29, 1
      %p61 = por %p59, %p60
      %p62 = scmp.ne.s32.totalorder %s51, %s52
      %p63 = scmp.eq.s32.totalorder %s29, 0
      %p64 = por %p62, %p63
      %p65 = scmp.ne.s32.totalorder %s51, %s52
      %p66 = scmp.eq.s32.totalorder %s30, 1
      %p67 = por %p65, %p66
      %p69 = scmp.ne.s32.totalorder %s52, %s68
      %p70 = scmp.eq.s32.totalorder %s30, 0
      %p71 = por %p69, %p70
      %s72 = ssub.s32 %s31, %s43
      %s73 = ssub.s32 %s32, %s39
      %s74 = sor.u32 %s72, %s73
      %p75 = scmp.eq.s32.totalorder %s74, 0
      %s77 = sadd.s32 %s76, 1
      %s78 = scalar_select %p75, %s76, %s77
      %p81 = pneg %p75
      %p82 = scmp.eq.s32.totalorder %s24, 1
      %p83 = por %p81, %p82
      %p84 = scmp.ne.s32.totalorder %s76, %s79
      %p85 = scmp.eq.s32.totalorder %s24, 0
      %p86 = por %p84, %p85
      %p87 = scmp.ne.s32.totalorder %s76, %s79
      %p88 = scmp.eq.s32.totalorder %s29, 1
      %p89 = por %p87, %p88
      %p90 = scmp.ne.s32.totalorder %s79, %s80
      %p91 = scmp.eq.s32.totalorder %s29, 0
      %p92 = por %p90, %p91
      %p93 = scmp.ne.s32.totalorder %s79, %s80
      %p94 = scmp.eq.s32.totalorder %s30, 1
      %p95 = por %p93, %p94
      %p97 = scmp.ne.s32.totalorder %s80, %s96
      %p98 = scmp.eq.s32.totalorder %s30, 0
      %p99 = por %p97, %p98
      %s100 = ssub.s32 %s32, %s39
      %p101 = scmp.eq.s32.totalorder %s100, 0
      %s103 = sadd.s32 %s102, 1
      %s104 = scalar_select %p101, %s102, %s103
      %p107 = pneg %p101
      %p108 = scmp.eq.s32.totalorder %s24, 1
      %p109 = por %p107, %p108
      %p110 = scmp.ne.s32.totalorder %s102, %s105
      %p111 = scmp.eq.s32.totalorder %s24, 0
      %p112 = por %p110, %p111
      %p113 = scmp.ne.s32.totalorder %s102, %s105
      %p114 = scmp.eq.s32.totalorder %s29, 1
      %p115 = por %p113, %p114
      %p116 = scmp.ne.s32.totalorder %s105, %s106
      %p117 = scmp.eq.s32.totalorder %s29, 0
      %p118 = por %p116, %p117
      %p119 = scmp.ne.s32.totalorder %s105, %s106
      %p120 = scmp.eq.s32.totalorder %s30, 1
      %p121 = por %p119, %p120
      %p123 = scmp.ne.s32.totalorder %s106, %s122
      %p124 = scmp.eq.s32.totalorder %s30, 0
      %p125 = por %p123, %p124
      %s127 = sadd.s32 %s126, 1
      %p130 = scmp.eq.s32.totalorder %s24, 1
      %p131 = scmp.ne.s32.totalorder %s126, %s128
      %p132 = scmp.eq.s32.totalorder %s24, 0
      %p133 = por %p131, %p132
      %p134 = scmp.ne.s32.totalorder %s126, %s128
      %p135 = scmp.eq.s32.totalorder %s29, 1
      %p136 = por %p134, %p135
      %p137 = scmp.ne.s32.totalorder %s128, %s129
      %p138 = scmp.eq.s32.totalorder %s29, 0
      %p139 = por %p137, %p138
      %p140 = scmp.ne.s32.totalorder %s128, %s129
      %p141 = scmp.eq.s32.totalorder %s30, 1
      %p142 = por %p140, %p141
      %p144 = scmp.ne.s32.totalorder %s129, %s143
      %p145 = scmp.eq.s32.totalorder %s30, 0
      %p146 = por %p144, %p145
      %s148 = sadd.s32 %s147, 1
      %p151 = scmp.eq.s32.totalorder %s24, 1
      %p152 = scmp.ne.s32.totalorder %s147, %s149
      %p153 = scmp.eq.s32.totalorder %s24, 0
      %p154 = por %p152, %p153
      %p155 = scmp.ne.s32.totalorder %s147, %s149
      %p156 = scmp.eq.s32.totalorder %s29, 1
      %p157 = por %p155, %p156
      %p158 = scmp.ne.s32.totalorder %s149, %s150
      %p159 = scmp.eq.s32.totalorder %s29, 0
      %p160 = por %p158, %p159
      %p161 = scmp.ne.s32.totalorder %s149, %s150
      %p162 = scmp.eq.s32.totalorder %s30, 1
      %p163 = por %p161, %p162
      %p165 = scmp.ne.s32.totalorder %s150, %s164
      %p166 = scmp.eq.s32.totalorder %s30, 0
      %p167 = por %p165, %p166
      %s169 = sadd.s32 %s168, 1
      %p172 = scmp.eq.s32.totalorder %s24, 1
      %p173 = scmp.ne.s32.totalorder %s168, %s170
      %p174 = scmp.eq.s32.totalorder %s24, 0
      %p175 = por %p173, %p174
      %p176 = scmp.ne.s32.totalorder %s168, %s170
      %p177 = scmp.eq.s32.totalorder %s29, 1
      %p178 = por %p176, %p177
      %p179 = scmp.ne.s32.totalorder %s170, %s171
      %p180 = scmp.eq.s32.totalorder %s29, 0
      %p181 = por %p179, %p180
      %p182 = scmp.ne.s32.totalorder %s170, %s171
      %p183 = scmp.eq.s32.totalorder %s30, 1
      %p184 = por %p182, %p183
      %p186 = scmp.ne.s32.totalorder %s171, %s185
      %p187 = scmp.eq.s32.totalorder %s30, 0
      %p188 = por %p186, %p187
      %s190 = sadd.s32 %s189, 1
      %p193 = scmp.eq.s32.totalorder %s24, 1
      %p194 = scmp.ne.s32.totalorder %s189, %s191
      %p195 = scmp.eq.s32.totalorder %s24, 0
      %p196 = por %p194, %p195
      %p197 = scmp.ne.s32.totalorder %s189, %s191
      %p198 = scmp.eq.s32.totalorder %s29, 1
      %p199 = por %p197, %p198
      %p200 = scmp.ne.s32.totalorder %s191, %s192
      %p201 = scmp.eq.s32.totalorder %s29, 0
      %p202 = por %p200, %p201
      %p203 = scmp.ne.s32.totalorder %s191, %s192
      %p204 = scmp.eq.s32.totalorder %s30, 1
      %p205 = por %p203, %p204
      %p207 = scmp.ne.s32.totalorder %s192, %s206
      %p208 = scmp.eq.s32.totalorder %s30, 0
      %p209 = por %p207, %p208
      %s211 = sadd.s32 %s210, 1
      %p214 = scmp.eq.s32.totalorder %s24, 1
      %p215 = scmp.ne.s32.totalorder %s210, %s212
      %p216 = scmp.eq.s32.totalorder %s24, 0
      %p217 = por %p215, %p216
      %p218 = scmp.ne.s32.totalorder %s210, %s212
      %p219 = scmp.eq.s32.totalorder %s29, 1
      %p220 = por %p218, %p219
      %p221 = scmp.ne.s32.totalorder %s212, %s213
      %p222 = scmp.eq.s32.totalorder %s29, 0
      %p223 = por %p221, %p222
      %p224 = scmp.ne.s32.totalorder %s212, %s213
      %p225 = scmp.eq.s32.totalorder %s30, 1
      %p226 = por %p224, %p225
      %p228 = scmp.ne.s32.totalorder %s213, %s227
      %p229 = scmp.eq.s32.totalorder %s30, 0
      %p230 = por %p228, %p229
      %s232 = sadd.s32 %s231, 1
      %p235 = scmp.eq.s32.totalorder %s24, 1
      %p236 = scmp.ne.s32.totalorder %s231, %s233
      %p237 = scmp.eq.s32.totalorder %s24, 0
      %p238 = por %p236, %p237
      %p239 = scmp.ne.s32.totalorder %s231, %s233
      %p240 = scmp.eq.s32.totalorder %s29, 1
      %p241 = por %p239, %p240
      %p242 = scmp.ne.s32.totalorder %s233, %s234
      %p243 = scmp.eq.s32.totalorder %s29, 0
      %p244 = por %p242, %p243
      %p245 = scmp.ne.s32.totalorder %s233, %s234
      %p246 = scmp.eq.s32.totalorder %s30, 1
      %p247 = por %p245, %p246
      %p249 = scmp.ne.s32.totalorder %s234, %s248
      %p250 = scmp.eq.s32.totalorder %s30, 0
      %p251 = por %p249, %p250
      %s253 = sadd.s32 %s252, 1
      %p256 = scmp.eq.s32.totalorder %s24, 1
      %p257 = scmp.ne.s32.totalorder %s252, %s254
      %p258 = scmp.eq.s32.totalorder %s24, 0
      %p259 = por %p257, %p258
      %p260 = scmp.ne.s32.totalorder %s252, %s254
      %p261 = scmp.eq.s32.totalorder %s29, 1
      %p262 = por %p260, %p261
      %p263 = scmp.ne.s32.totalorder %s254, %s255
      %p264 = scmp.eq.s32.totalorder %s29, 0
      %p265 = por %p263, %p264
      %p266 = scmp.ne.s32.totalorder %s254, %s255
      %p267 = scmp.eq.s32.totalorder %s30, 1
      %p268 = por %p266, %p267
      %p270 = scmp.ne.s32.totalorder %s255, %s269
      %p271 = scmp.eq.s32.totalorder %s30, 0
      %p272 = por %p270, %p271
      %s274 = sadd.s32 %s273, 1
      %p277 = scmp.eq.s32.totalorder %s24, 1
      %p278 = scmp.ne.s32.totalorder %s273, %s275
      %p279 = scmp.eq.s32.totalorder %s24, 0
      %p280 = por %p278, %p279
      %p281 = scmp.ne.s32.totalorder %s273, %s275
      %p282 = scmp.eq.s32.totalorder %s29, 1
      %p283 = por %p281, %p282
      %p284 = scmp.ne.s32.totalorder %s275, %s276
      %p285 = scmp.eq.s32.totalorder %s29, 0
      %p286 = por %p284, %p285
      %p287 = scmp.ne.s32.totalorder %s275, %s276
      %p288 = scmp.eq.s32.totalorder %s30, 1
      %p289 = por %p287, %p288
      %p291 = scmp.ne.s32.totalorder %s276, %s290
      %p292 = scmp.eq.s32.totalorder %s30, 0
      %p293 = por %p291, %p292
      %s294 = ssub.s32 %s31, %s43
      %s295 = ssub.s32 %s32, %s39
      %s296 = sor.u32 %s294, %s295
      %p297 = scmp.eq.s32.totalorder %s296, 0
      %s299 = sadd.s32 %s298, 1
      %s300 = scalar_select %p297, %s298, %s299
      %p303 = pneg %p297
      %p304 = scmp.eq.s32.totalorder %s24, 1
      %p305 = por %p303, %p304
      %p306 = scmp.ne.s32.totalorder %s298, %s301
      %p307 = scmp.eq.s32.totalorder %s24, 0
      %p308 = por %p306, %p307
      %p309 = scmp.ne.s32.totalorder %s298, %s301
      %p310 = scmp.eq.s32.totalorder %s29, 1
      %p311 = por %p309, %p310
      %p312 = scmp.ne.s32.totalorder %s301, %s302
      %p313 = scmp.eq.s32.totalorder %s29, 0
      %p314 = por %p312, %p313
      %p315 = scmp.ne.s32.totalorder %s301, %s302
      %p316 = scmp.eq.s32.totalorder %s30, 1
      %p317 = por %p315, %p316
      %p319 = scmp.ne.s32.totalorder %s302, %s318
      %p320 = scmp.eq.s32.totalorder %s30, 0
      %p321 = por %p319, %p320
      %p322 = scmp.le.s32.totalorder 1, %s24
      %p323 = scmp.lt.s32.totalorder %s24, 3
      %p324 = pnand %p322, %p323
      %p325 = pneg %p324
      // Predicated region
      $region9: #{tpu_custom_call.1} parent=5 // pred_check
        _
      $region10: #{tpu_custom_call.1} parent=5 // pred_check_branch
        %327 = sbr.rel (%p324) target = $region12
      $region11: #{tpu_custom_call.1} parent=5 // pred_region
        %s328 = ssub.s32 %s24, 1
        // Predicated region
        $region13: #{tpu_custom_call.1} parent=11 // pred_check
          %p329 = pneg %p118
        $region14: #{tpu_custom_call.1} parent=11 // pred_check_branch
          %331 = sbr.rel (%p329) target = $region16
        $region15: #{tpu_custom_call.1} parent=11 // pred_region
          %s332 = smul.u32 2, %s34
          %p333 = scmp.lt.s32.totalorder %s332, 1
          %s334 = scalar_select %p333, %s332, 1
          %s335 = smul.addr %s334, 8
          %s336 = scalar_lea.vmem %s2, %s335
          %s337 = smul.u32 2, %s34
        $region16: #{tpu_custom_call.1} parent=11 // pred_fallthru
          _
        // Predicated region
        $region17: #{tpu_custom_call.1} parent=11 // pred_check
          %p338 = pneg %p139
        $region18: #{tpu_custom_call.1} parent=11 // pred_check_branch
          %340 = sbr.rel (%p338) target = $region20
        $region19: #{tpu_custom_call.1} parent=11 // pred_region
          %342 = vsyncadd [#allocation6], 0
          %s343 = sshll.u32 %s3, 4
          %s344 = int_to_ptr.hbm [resolvable:$true] %s343
          %s345 = sshll.u32 [#allocation5], 4
          %s346 = int_to_ptr.vmem [resolvable:$true] %s345
          %351 = dma.hbm_to_vmem [thread:$0]  %s344, 16384, %s346, [#allocation6], 64, 64, 4
        $region20: #{tpu_custom_call.1} parent=11 // pred_fallthru
          _
        // Predicated region
        $region21: #{tpu_custom_call.1} parent=11 // pred_check
          %p352 = pneg %p160
        $region22: #{tpu_custom_call.1} parent=11 // pred_check_branch
          %354 = sbr.rel (%p352) target = $region24
        $region23: #{tpu_custom_call.1} parent=11 // pred_region
          _
        $region24: #{tpu_custom_call.1} parent=11 // pred_fallthru
          _
        // Predicated region
        $region25: #{tpu_custom_call.1} parent=11 // pred_check
          %p355 = pneg %p181
        $region26: #{tpu_custom_call.1} parent=11 // pred_check_branch
          %357 = sbr.rel (%p355) target = $region28
        $region27: #{tpu_custom_call.1} parent=11 // pred_region
          _
        $region28: #{tpu_custom_call.1} parent=11 // pred_fallthru
          _
        // Predicated region
        $region29: #{tpu_custom_call.1} parent=11 // pred_check
          %p358 = pneg %p202
        $region30: #{tpu_custom_call.1} parent=11 // pred_check_branch
          %360 = sbr.rel (%p358) target = $region32
        $region31: #{tpu_custom_call.1} parent=11 // pred_region
          _
        $region32: #{tpu_custom_call.1} parent=11 // pred_fallthru
          _
        // Predicated region
        $region33: #{tpu_custom_call.1} parent=11 // pred_check
          %p361 = pneg %p223
        $region34: #{tpu_custom_call.1} parent=11 // pred_check_branch
          %363 = sbr.rel (%p361) target = $region36
        $region35: #{tpu_custom_call.1} parent=11 // pred_region
          _
        $region36: #{tpu_custom_call.1} parent=11 // pred_fallthru
          _
        // Predicated region
        $region37: #{tpu_custom_call.1} parent=11 // pred_check
          %p364 = pneg %p244
        $region38: #{tpu_custom_call.1} parent=11 // pred_check_branch
          %366 = sbr.rel (%p364) target = $region40
        $region39: #{tpu_custom_call.1} parent=11 // pred_region
          _
        $region40: #{tpu_custom_call.1} parent=11 // pred_fallthru
          _
        // Predicated region
        $region41: #{tpu_custom_call.1} parent=11 // pred_check
          %p367 = pneg %p265
        $region42: #{tpu_custom_call.1} parent=11 // pred_check_branch
          %369 = sbr.rel (%p367) target = $region44
        $region43: #{tpu_custom_call.1} parent=11 // pred_region
          _
        $region44: #{tpu_custom_call.1} parent=11 // pred_fallthru
          _
        // Predicated region
        $region45: #{tpu_custom_call.1} parent=11 // pred_check
          %p370 = pneg %p286
        $region46: #{tpu_custom_call.1} parent=11 // pred_check_branch
          %372 = sbr.rel (%p370) target = $region48
        $region47: #{tpu_custom_call.1} parent=11 // pred_region
          _
        $region48: #{tpu_custom_call.1} parent=11 // pred_fallthru
          _
      $region12: #{tpu_custom_call.1} parent=5 // pred_fallthru
        _
      %p373 = scmp.lt.s32.totalorder %s24, 2
      // Predicated region
      $region49: #{tpu_custom_call.1} parent=5 // pred_check
        %p374 = pneg %p373
      $region50: #{tpu_custom_call.1} parent=5 // pred_check_branch
        %376 = sbr.rel (%p374) target = $region52
      $region51: #{tpu_custom_call.1} parent=5 // pred_region
        // Predicated region
        $region53: #{tpu_custom_call.1} parent=51 // pred_check
          %p377 = pneg %p58
        $region54: #{tpu_custom_call.1} parent=51 // pred_check_branch
          %379 = sbr.rel (%p377) target = $region56
        $region55: #{tpu_custom_call.1} parent=51 // pred_region
          %s380 = sand.u32 %s48, 1
          %s381 = scalar_lea.sflag [#allocation3], %s380
          %s382 = sand.u32 %s48, 1
          %s383 = smul.addr %s382, 256
          %s384 = scalar_lea.vmem [#allocation2], %s383
          %s385 = smul.u32 2, %s32
          %387 = vsyncadd %s381, 0
          %s388 = smul.addr %s385, 16
          %s389 = smul.addr %s31, 32
          %s390 = sadd.s32 %s388, %s389
          %s391 = smul.addr %s390, 8
          %s392 = scalar_lea.hbm %s0, %s391
          %s393 = sshll.u32 %s392, 4
          %s394 = int_to_ptr.hbm [resolvable:$true] %s393
          %s395 = sshll.u32 %s384, 4
          %s396 = int_to_ptr.vmem [resolvable:$true] %s395
          %401 = dma.hbm_to_vmem [thread:$0]  %s394, 4096, %s396, %s381, 2048, 2048, 128
        $region56: #{tpu_custom_call.1} parent=51 // pred_fallthru
          _
        // Predicated region
        $region57: #{tpu_custom_call.1} parent=51 // pred_check
          %p402 = pneg %p86
        $region58: #{tpu_custom_call.1} parent=51 // pred_check_branch
          %404 = sbr.rel (%p402) target = $region60
        $region59: #{tpu_custom_call.1} parent=51 // pred_region
          %s405 = smul.u32 2, %s32
          %p406 = scmp.lt.s32.totalorder %s31, 1
          %s407 = scalar_select %p406, %s31, 1
          %p408 = scmp.lt.s32.totalorder %s405, 1
          %s409 = scalar_select %p408, %s405, 1
          %s410 = smul.addr %s407, 2
          %s411 = sadd.s32 %s409, %s410
          %s412 = smul.addr %s411, 8
          %s413 = scalar_lea.vmem %s1, %s412
          %s414 = smul.u32 2, %s32
        $region60: #{tpu_custom_call.1} parent=51 // pred_fallthru
          _
      $region52: #{tpu_custom_call.1} parent=5 // pred_fallthru
        _
      %p415 = scmp.le.s32.totalorder 1, %s24
      %p416 = scmp.lt.s32.totalorder %s24, 3
      %p417 = pnand %p415, %p416
      %p418 = pneg %p417
      // Predicated region
      $region61: #{tpu_custom_call.1} parent=5 // pred_check
        _
      $region62: #{tpu_custom_call.1} parent=5 // pred_check_branch
        %420 = sbr.rel (%p417) target = $region64
      $region63: #{tpu_custom_call.1} parent=5 // pred_region
        %s421 = ssub.s32 %s24, 1
        %s422 = sand.u32 %s51, 1
        %s423 = scalar_lea.sflag [#allocation3], %s422
        %s424 = sand.u32 %s51, 1
        %s425 = smul.addr %s424, 256
        %s426 = scalar_lea.vmem [#allocation2], %s425
        // Predicated region
        $region65: #{tpu_custom_call.1} parent=63 // pred_check
          %p427 = pneg %p64
        $region66: #{tpu_custom_call.1} parent=63 // pred_check_branch
          %429 = sbr.rel (%p427) target = $region68
        $region67: #{tpu_custom_call.1} parent=63 // pred_region
          %431 = dma.done %s423, 4096
        $region68: #{tpu_custom_call.1} parent=63 // pred_fallthru
          _
        // Predicated region
        $region69: #{tpu_custom_call.1} parent=63 // pred_check
          %p432 = pneg %p139
        $region70: #{tpu_custom_call.1} parent=63 // pred_check_branch
          %434 = sbr.rel (%p432) target = $region72
        $region71: #{tpu_custom_call.1} parent=63 // pred_region
          %436 = dma.done [#allocation6], 16384
        $region72: #{tpu_custom_call.1} parent=63 // pred_fallthru
          _
        %s437 = sand.u32 %s51, 1
        %s438 = scalar_lea.sflag [#allocation3], %s437
        %s439 = sand.u32 %s51, 1
        %s440 = smul.addr %s439, 256
        %s441 = scalar_lea.vmem [#allocation2], %s440
        %p442 = pneg %p64
        %p443 = pneg %p61
        %s444 = smul.u32 2, %s34
        %p445 = scmp.lt.s32.totalorder %s33, 1
        %s446 = scalar_select %p445, %s33, 1
        %p447 = scmp.lt.s32.totalorder %s444, 1
        %s448 = scalar_select %p447, %s444, 1
        %s449 = smul.addr %s446, 2
        %s450 = sadd.s32 %s448, %s449
        %s451 = smul.addr %s450, 8
        %s452 = scalar_lea.vmem %s1, %s451
        %p453 = pneg %p92
        %p454 = pneg %p89
        %s455 = smul.u32 2, %s34
        %p456 = scmp.lt.s32.totalorder %s455, 1
        %s457 = scalar_select %p456, %s455, 1
        %s458 = smul.addr %s457, 8
        %s459 = scalar_lea.vmem %s2, %s458
        %p460 = pneg %p118
        %p461 = pneg %p115
        %p462 = pneg %p139
        %p463 = pneg %p136
        %p464 = pneg %p160
        %p465 = pneg %p157
        %p466 = pneg %p181
        %p467 = pneg %p178
        %p468 = pneg %p202
        %p469 = pneg %p199
        %p470 = pneg %p223
        %p471 = pneg %p220
        %p472 = pneg %p244
        %p473 = pneg %p241
        %p474 = pneg %p265
        %p475 = pneg %p262
        %p476 = pneg %p286
        %p477 = pneg %p283
        %p478 = pneg %p314
        %p479 = pneg %p311
        %s480 = sand.u32 %s301, 1
        %s481 = scalar_lea.sflag [#allocation4], %s480
        %s482 = sand.u32 %s301, 1
        %s483 = smul.addr %s482, 16
        %s484 = scalar_lea.vmem [#allocation7], %s483
        %s485 = smul.u32 2, %s34
        %s486 = smul.u32 2, %s34
        %p487 = scmp.lt.s32.totalorder %s33, 1
        %s488 = scalar_select %p487, %s33, 1
        %p489 = scmp.lt.s32.totalorder %s486, 1
        %s490 = scalar_select %p489, %s486, 1
        %s491 = smul.addr %s488, 2
        %s492 = sadd.s32 %s490, %s491
        %s493 = smul.addr %s492, 8
        %s494 = scalar_lea.vmem %s1, %s493
        %s495 = smul.u32 2, %s34
        %s496 = smul.u32 2, %s34
        %p497 = scmp.lt.s32.totalorder %s496, 1
        %s498 = scalar_select %p497, %s496, 1
        %s499 = smul.addr %s498, 8
        %s500 = scalar_lea.vmem %s2, %s499
        %s501 = smul.u32 2, %s34
        %s502 = smul.u32 2, %s34
        %v503 = vld [vmem:[%s426] sm:$0xff]
        %v504 = vld [vmem:[%s426 + $0x8] sm:$0xff]
        %v505 = vld [vmem:[%s426 + $0x10] sm:$0xff]
        %v506 = vld [vmem:[%s426 + $0x18] sm:$0xff]
        %v507 = vld [vmem:[%s426 + $0x20] sm:$0xff]
        %v508 = vld [vmem:[%s426 + $0x28] sm:$0xff]
        %v509 = vld [vmem:[%s426 + $0x30] sm:$0xff]
        %v510 = vld [vmem:[%s426 + $0x38] sm:$0xff]
        %v511 = vld [vmem:[%s426 + $0x40] sm:$0xff]
        %v512 = vld [vmem:[%s426 + $0x48] sm:$0xff]
        %v513 = vld [vmem:[%s426 + $0x50] sm:$0xff]
        %v514 = vld [vmem:[%s426 + $0x58] sm:$0xff]
        %v515 = vld [vmem:[%s426 + $0x60] sm:$0xff]
        %v516 = vld [vmem:[%s426 + $0x68] sm:$0xff]
        %v517 = vld [vmem:[%s426 + $0x70] sm:$0xff]
        %v518 = vld [vmem:[%s426 + $0x78] sm:$0xff]
        %v519 = vld [vmem:[%s426 + $0x80] sm:$0xff]
        %v520 = vld [vmem:[%s426 + $0x88] sm:$0xff]
        %v521 = vld [vmem:[%s426 + $0x90] sm:$0xff]
        %v522 = vld [vmem:[%s426 + $0x98] sm:$0xff]
        %v523 = vld [vmem:[%s426 + $0xa0] sm:$0xff]
        %v524 = vld [vmem:[%s426 + $0xa8] sm:$0xff]
        %v525 = vld [vmem:[%s426 + $0xb0] sm:$0xff]
        %v526 = vld [vmem:[%s426 + $0xb8] sm:$0xff]
        %v527 = vld [vmem:[%s426 + $0xc0] sm:$0xff]
        %v528 = vld [vmem:[%s426 + $0xc8] sm:$0xff]
        %v529 = vld [vmem:[%s426 + $0xd0] sm:$0xff]
        %v530 = vld [vmem:[%s426 + $0xd8] sm:$0xff]
        %v531 = vld [vmem:[%s426 + $0xe0] sm:$0xff]
        %v532 = vld [vmem:[%s426 + $0xe8] sm:$0xff]
        %v533 = vld [vmem:[%s426 + $0xf0] sm:$0xff]
        %v534 = vld [vmem:[%s426 + $0xf8] sm:$0xff]
        %v535 = vpack.c.bf16 %v519, %v503
        %v536 = vpack.c.bf16 %v520, %v504
        %v537 = vpack.c.bf16 %v521, %v505
        %v538 = vpack.c.bf16 %v522, %v506
        %v539 = vpack.c.bf16 %v523, %v507
        %v540 = vpack.c.bf16 %v524, %v508
        %v541 = vpack.c.bf16 %v525, %v509
        %v542 = vpack.c.bf16 %v526, %v510
        %v543 = vpack.c.bf16 %v527, %v511
        %v544 = vpack.c.bf16 %v528, %v512
        %v545 = vpack.c.bf16 %v529, %v513
        %v546 = vpack.c.bf16 %v530, %v514
        %v547 = vpack.c.bf16 %v531, %v515
        %v548 = vpack.c.bf16 %v532, %v516
        %v549 = vpack.c.bf16 %v533, %v517
        %v550 = vpack.c.bf16 %v534, %v518
        %v551 = vld [vmem:[#allocation5] sm:$0xf]
        %v552 = vld [vmem:[#allocation5 + $0x4] sm:$0xf]
        %v553 = vld [vmem:[#allocation5 + $0x8] sm:$0xf]
        %v554 = vld [vmem:[#allocation5 + $0xc] sm:$0xf]
        %v555 = vld [vmem:[#allocation5 + $0x10] sm:$0xf]
        %v556 = vld [vmem:[#allocation5 + $0x14] sm:$0xf]
        %v557 = vld [vmem:[#allocation5 + $0x18] sm:$0xf]
        %v558 = vld [vmem:[#allocation5 + $0x1c] sm:$0xf]
        %v559 = vld [vmem:[#allocation5 + $0x20] sm:$0xf]
        %v560 = vld [vmem:[#allocation5 + $0x24] sm:$0xf]
        %v561 = vld [vmem:[#allocation5 + $0x28] sm:$0xf]
        %v562 = vld [vmem:[#allocation5 + $0x2c] sm:$0xf]
        %v563 = vld [vmem:[#allocation5 + $0x30] sm:$0xf]
        %v564 = vld [vmem:[#allocation5 + $0x34] sm:$0xf]
        %v565 = vld [vmem:[#allocation5 + $0x38] sm:$0xf]
        %v566 = vld [vmem:[#allocation5 + $0x3c] sm:$0xf]
        %v567 = vld [vmem:[#allocation5 + $0x40] sm:$0xf]
        %v568 = vld [vmem:[#allocation5 + $0x44] sm:$0xf]
        %v569 = vld [vmem:[#allocation5 + $0x48] sm:$0xf]
        %v570 = vld [vmem:[#allocation5 + $0x4c] sm:$0xf]
        %v571 = vld [vmem:[#allocation5 + $0x50] sm:$0xf]
        %v572 = vld [vmem:[#allocation5 + $0x54] sm:$0xf]
        %v573 = vld [vmem:[#allocation5 + $0x58] sm:$0xf]
        %v574 = vld [vmem:[#allocation5 + $0x5c] sm:$0xf]
        %v575 = vld [vmem:[#allocation5 + $0x60] sm:$0xf]
        %v576 = vld [vmem:[#allocation5 + $0x64] sm:$0xf]
        %v577 = vld [vmem:[#allocation5 + $0x68] sm:$0xf]
        %v578 = vld [vmem:[#allocation5 + $0x6c] sm:$0xf]
        %v579 = vld [vmem:[#allocation5 + $0x70] sm:$0xf]
        %v580 = vld [vmem:[#allocation5 + $0x74] sm:$0xf]
        %v581 = vld [vmem:[#allocation5 + $0x78] sm:$0xf]
        %v582 = vld [vmem:[#allocation5 + $0x7c] sm:$0xf]
        %v583 = vld [vmem:[#allocation5 + $0x80] sm:$0xf]
        %v584 = vld [vmem:[#allocation5 + $0x84] sm:$0xf]
        %v585 = vld [vmem:[#allocation5 + $0x88] sm:$0xf]
        %v586 = vld [vmem:[#allocation5 + $0x8c] sm:$0xf]
        %v587 = vld [vmem:[#allocation5 + $0x90] sm:$0xf]
        %v588 = vld [vmem:[#allocation5 + $0x94] sm:$0xf]
        %v589 = vld [vmem:[#allocation5 + $0x98] sm:$0xf]
        %v590 = vld [vmem:[#allocation5 + $0x9c] sm:$0xf]
        %v591 = vld [vmem:[#allocation5 + $0xa0] sm:$0xf]
        %v592 = vld [vmem:[#allocation5 + $0xa4] sm:$0xf]
        %v593 = vld [vmem:[#allocation5 + $0xa8] sm:$0xf]
        %v594 = vld [vmem:[#allocation5 + $0xac] sm:$0xf]
        %v595 = vld [vmem:[#allocation5 + $0xb0] sm:$0xf]
        %v596 = vld [vmem:[#allocation5 + $0xb4] sm:$0xf]
        %v597 = vld [vmem:[#allocation5 + $0xb8] sm:$0xf]
        %v598 = vld [vmem:[#allocation5 + $0xbc] sm:$0xf]
        %v599 = vld [vmem:[#allocation5 + $0xc0] sm:$0xf]
        %v600 = vld [vmem:[#allocation5 + $0xc4] sm:$0xf]
        %v601 = vld [vmem:[#allocation5 + $0xc8] sm:$0xf]
        %v602 = vld [vmem:[#allocation5 + $0xcc] sm:$0xf]
        %v603 = vld [vmem:[#allocation5 + $0xd0] sm:$0xf]
        %v604 = vld [vmem:[#allocation5 + $0xd4] sm:$0xf]
        %v605 = vld [vmem:[#allocation5 + $0xd8] sm:$0xf]
        %v606 = vld [vmem:[#allocation5 + $0xdc] sm:$0xf]
        %v607 = vld [vmem:[#allocation5 + $0xe0] sm:$0xf]
        %v608 = vld [vmem:[#allocation5 + $0xe4] sm:$0xf]
        %v609 = vld [vmem:[#allocation5 + $0xe8] sm:$0xf]
        %v610 = vld [vmem:[#allocation5 + $0xec] sm:$0xf]
        %v611 = vld [vmem:[#allocation5 + $0xf0] sm:$0xf]
        %v612 = vld [vmem:[#allocation5 + $0xf4] sm:$0xf]
        %v613 = vld [vmem:[#allocation5 + $0xf8] sm:$0xf]
        %v614 = vld [vmem:[#allocation5 + $0xfc] sm:$0xf]
        %v615 = vld [vmem:[#allocation5 + $0x100] sm:$0xf]
        %v616 = vld [vmem:[#allocation5 + $0x104] sm:$0xf]
        %v617 = vld [vmem:[#allocation5 + $0x108] sm:$0xf]
        %v618 = vld [vmem:[#allocation5 + $0x10c] sm:$0xf]
        %v619 = vld [vmem:[#allocation5 + $0x110] sm:$0xf]
        %v620 = vld [vmem:[#allocation5 + $0x114] sm:$0xf]
        %v621 = vld [vmem:[#allocation5 + $0x118] sm:$0xf]
        %v622 = vld [vmem:[#allocation5 + $0x11c] sm:$0xf]
        %v623 = vld [vmem:[#allocation5 + $0x120] sm:$0xf]
        %v624 = vld [vmem:[#allocation5 + $0x124] sm:$0xf]
        %v625 = vld [vmem:[#allocation5 + $0x128] sm:$0xf]
        %v626 = vld [vmem:[#allocation5 + $0x12c] sm:$0xf]
        %v627 = vld [vmem:[#allocation5 + $0x130] sm:$0xf]
        %v628 = vld [vmem:[#allocation5 + $0x134] sm:$0xf]
        %v629 = vld [vmem:[#allocation5 + $0x138] sm:$0xf]
        %v630 = vld [vmem:[#allocation5 + $0x13c] sm:$0xf]
        %v631 = vld [vmem:[#allocation5 + $0x140] sm:$0xf]
        %v632 = vld [vmem:[#allocation5 + $0x144] sm:$0xf]
        %v633 = vld [vmem:[#allocation5 + $0x148] sm:$0xf]
        %v634 = vld [vmem:[#allocation5 + $0x14c] sm:$0xf]
        %v635 = vld [vmem:[#allocation5 + $0x150] sm:$0xf]
        %v636 = vld [vmem:[#allocation5 + $0x154] sm:$0xf]
        %v637 = vld [vmem:[#allocation5 + $0x158] sm:$0xf]
        %v638 = vld [vmem:[#allocation5 + $0x15c] sm:$0xf]
        %v639 = vld [vmem:[#allocation5 + $0x160] sm:$0xf]
        %v640 = vld [vmem:[#allocation5 + $0x164] sm:$0xf]
        %v641 = vld [vmem:[#allocation5 + $0x168] sm:$0xf]
        %v642 = vld [vmem:[#allocation5 + $0x16c] sm:$0xf]
        %v643 = vld [vmem:[#allocation5 + $0x170] sm:$0xf]
        %v644 = vld [vmem:[#allocation5 + $0x174] sm:$0xf]
        %v645 = vld [vmem:[#allocation5 + $0x178] sm:$0xf]
        %v646 = vld [vmem:[#allocation5 + $0x17c] sm:$0xf]
        %v647 = vld [vmem:[#allocation5 + $0x180] sm:$0xf]
        %v648 = vld [vmem:[#allocation5 + $0x184] sm:$0xf]
        %v649 = vld [vmem:[#allocation5 + $0x188] sm:$0xf]
        %v650 = vld [vmem:[#allocation5 + $0x18c] sm:$0xf]
        %v651 = vld [vmem:[#allocation5 + $0x190] sm:$0xf]
        %v652 = vld [vmem:[#allocation5 + $0x194] sm:$0xf]
        %v653 = vld [vmem:[#allocation5 + $0x198] sm:$0xf]
        %v654 = vld [vmem:[#allocation5 + $0x19c] sm:$0xf]
        %v655 = vld [vmem:[#allocation5 + $0x1a0] sm:$0xf]
        %v656 = vld [vmem:[#allocation5 + $0x1a4] sm:$0xf]
        %v657 = vld [vmem:[#allocation5 + $0x1a8] sm:$0xf]
        %v658 = vld [vmem:[#allocation5 + $0x1ac] sm:$0xf]
        %v659 = vld [vmem:[#allocation5 + $0x1b0] sm:$0xf]
        %v660 = vld [vmem:[#allocation5 + $0x1b4] sm:$0xf]
        %v661 = vld [vmem:[#allocation5 + $0x1b8] sm:$0xf]
        %v662 = vld [vmem:[#allocation5 + $0x1bc] sm:$0xf]
        %v663 = vld [vmem:[#allocation5 + $0x1c0] sm:$0xf]
        %v664 = vld [vmem:[#allocation5 + $0x1c4] sm:$0xf]
        %v665 = vld [vmem:[#allocation5 + $0x1c8] sm:$0xf]
        %v666 = vld [vmem:[#allocation5 + $0x1cc] sm:$0xf]
        %v667 = vld [vmem:[#allocation5 + $0x1d0] sm:$0xf]
        %v668 = vld [vmem:[#allocation5 + $0x1d4] sm:$0xf]
        %v669 = vld [vmem:[#allocation5 + $0x1d8] sm:$0xf]
        %v670 = vld [vmem:[#allocation5 + $0x1dc] sm:$0xf]
        %v671 = vld [vmem:[#allocation5 + $0x1e0] sm:$0xf]
        %v672 = vld [vmem:[#allocation5 + $0x1e4] sm:$0xf]
        %v673 = vld [vmem:[#allocation5 + $0x1e8] sm:$0xf]
        %v674 = vld [vmem:[#allocation5 + $0x1ec] sm:$0xf]
        %v675 = vld [vmem:[#allocation5 + $0x1f0] sm:$0xf]
        %v676 = vld [vmem:[#allocation5 + $0x1f4] sm:$0xf]
        %v677 = vld [vmem:[#allocation5 + $0x1f8] sm:$0xf]
        %v678 = vld [vmem:[#allocation5 + $0x1fc] sm:$0xf]
        %v679 = vld [vmem:[#allocation5 + $0x200] sm:$0xf]
        %v680 = vld [vmem:[#allocation5 + $0x204] sm:$0xf]
        %v681 = vld [vmem:[#allocation5 + $0x208] sm:$0xf]
        %v682 = vld [vmem:[#allocation5 + $0x20c] sm:$0xf]
        %v683 = vld [vmem:[#allocation5 + $0x210] sm:$0xf]
        %v684 = vld [vmem:[#allocation5 + $0x214] sm:$0xf]
        %v685 = vld [vmem:[#allocation5 + $0x218] sm:$0xf]
        %v686 = vld [vmem:[#allocation5 + $0x21c] sm:$0xf]
        %v687 = vld [vmem:[#allocation5 + $0x220] sm:$0xf]
        %v688 = vld [vmem:[#allocation5 + $0x224] sm:$0xf]
        %v689 = vld [vmem:[#allocation5 + $0x228] sm:$0xf]
        %v690 = vld [vmem:[#allocation5 + $0x22c] sm:$0xf]
        %v691 = vld [vmem:[#allocation5 + $0x230] sm:$0xf]
        %v692 = vld [vmem:[#allocation5 + $0x234] sm:$0xf]
        %v693 = vld [vmem:[#allocation5 + $0x238] sm:$0xf]
        %v694 = vld [vmem:[#allocation5 + $0x23c] sm:$0xf]
        %v695 = vld [vmem:[#allocation5 + $0x240] sm:$0xf]
        %v696 = vld [vmem:[#allocation5 + $0x244] sm:$0xf]
        %v697 = vld [vmem:[#allocation5 + $0x248] sm:$0xf]
        %v698 = vld [vmem:[#allocation5 + $0x24c] sm:$0xf]
        %v699 = vld [vmem:[#allocation5 + $0x250] sm:$0xf]
        %v700 = vld [vmem:[#allocation5 + $0x254] sm:$0xf]
        %v701 = vld [vmem:[#allocation5 + $0x258] sm:$0xf]
        %v702 = vld [vmem:[#allocation5 + $0x25c] sm:$0xf]
        %v703 = vld [vmem:[#allocation5 + $0x260] sm:$0xf]
        %v704 = vld [vmem:[#allocation5 + $0x264] sm:$0xf]
        %v705 = vld [vmem:[#allocation5 + $0x268] sm:$0xf]
        %v706 = vld [vmem:[#allocation5 + $0x26c] sm:$0xf]
        %v707 = vld [vmem:[#allocation5 + $0x270] sm:$0xf]
        %v708 = vld [vmem:[#allocation5 + $0x274] sm:$0xf]
        %v709 = vld [vmem:[#allocation5 + $0x278] sm:$0xf]
        %v710 = vld [vmem:[#allocation5 + $0x27c] sm:$0xf]
        %v711 = vld [vmem:[#allocation5 + $0x280] sm:$0xf]
        %v712 = vld [vmem:[#allocation5 + $0x284] sm:$0xf]
        %v713 = vld [vmem:[#allocation5 + $0x288] sm:$0xf]
        %v714 = vld [vmem:[#allocation5 + $0x28c] sm:$0xf]
        %v715 = vld [vmem:[#allocation5 + $0x290] sm:$0xf]
        %v716 = vld [vmem:[#allocation5 + $0x294] sm:$0xf]
        %v717 = vld [vmem:[#allocation5 + $0x298] sm:$0xf]
        %v718 = vld [vmem:[#allocation5 + $0x29c] sm:$0xf]
        %v719 = vld [vmem:[#allocation5 + $0x2a0] sm:$0xf]
        %v720 = vld [vmem:[#allocation5 + $0x2a4] sm:$0xf]
        %v721 = vld [vmem:[#allocation5 + $0x2a8] sm:$0xf]
        %v722 = vld [vmem:[#allocation5 + $0x2ac] sm:$0xf]
        %v723 = vld [vmem:[#allocation5 + $0x2b0] sm:$0xf]
        %v724 = vld [vmem:[#allocation5 + $0x2b4] sm:$0xf]
        %v725 = vld [vmem:[#allocation5 + $0x2b8] sm:$0xf]
        %v726 = vld [vmem:[#allocation5 + $0x2bc] sm:$0xf]
        %v727 = vld [vmem:[#allocation5 + $0x2c0] sm:$0xf]
        %v728 = vld [vmem:[#allocation5 + $0x2c4] sm:$0xf]
        %v729 = vld [vmem:[#allocation5 + $0x2c8] sm:$0xf]
        %v730 = vld [vmem:[#allocation5 + $0x2cc] sm:$0xf]
        %v731 = vld [vmem:[#allocation5 + $0x2d0] sm:$0xf]
        %v732 = vld [vmem:[#allocation5 + $0x2d4] sm:$0xf]
        %v733 = vld [vmem:[#allocation5 + $0x2d8] sm:$0xf]
        %v734 = vld [vmem:[#allocation5 + $0x2dc] sm:$0xf]
        %v735 = vld [vmem:[#allocation5 + $0x2e0] sm:$0xf]
        %v736 = vld [vmem:[#allocation5 + $0x2e4] sm:$0xf]
        %v737 = vld [vmem:[#allocation5 + $0x2e8] sm:$0xf]
        %v738 = vld [vmem:[#allocation5 + $0x2ec] sm:$0xf]
        %v739 = vld [vmem:[#allocation5 + $0x2f0] sm:$0xf]
        %v740 = vld [vmem:[#allocation5 + $0x2f4] sm:$0xf]
        %v741 = vld [vmem:[#allocation5 + $0x2f8] sm:$0xf]
        %v742 = vld [vmem:[#allocation5 + $0x2fc] sm:$0xf]
        %v743 = vld [vmem:[#allocation5 + $0x300] sm:$0xf]
        %v744 = vld [vmem:[#allocation5 + $0x304] sm:$0xf]
        %v745 = vld [vmem:[#allocation5 + $0x308] sm:$0xf]
        %v746 = vld [vmem:[#allocation5 + $0x30c] sm:$0xf]
        %v747 = vld [vmem:[#allocation5 + $0x310] sm:$0xf]
        %v748 = vld [vmem:[#allocation5 + $0x314] sm:$0xf]
        %v749 = vld [vmem:[#allocation5 + $0x318] sm:$0xf]
        %v750 = vld [vmem:[#allocation5 + $0x31c] sm:$0xf]
        %v751 = vld [vmem:[#allocation5 + $0x320] sm:$0xf]
        %v752 = vld [vmem:[#allocation5 + $0x324] sm:$0xf]
        %v753 = vld [vmem:[#allocation5 + $0x328] sm:$0xf]
        %v754 = vld [vmem:[#allocation5 + $0x32c] sm:$0xf]
        %v755 = vld [vmem:[#allocation5 + $0x330] sm:$0xf]
        %v756 = vld [vmem:[#allocation5 + $0x334] sm:$0xf]
        %v757 = vld [vmem:[#allocation5 + $0x338] sm:$0xf]
        %v758 = vld [vmem:[#allocation5 + $0x33c] sm:$0xf]
        %v759 = vld [vmem:[#allocation5 + $0x340] sm:$0xf]
        %v760 = vld [vmem:[#allocation5 + $0x344] sm:$0xf]
        %v761 = vld [vmem:[#allocation5 + $0x348] sm:$0xf]
        %v762 = vld [vmem:[#allocation5 + $0x34c] sm:$0xf]
        %v763 = vld [vmem:[#allocation5 + $0x350] sm:$0xf]
        %v764 = vld [vmem:[#allocation5 + $0x354] sm:$0xf]
        %v765 = vld [vmem:[#allocation5 + $0x358] sm:$0xf]
        %v766 = vld [vmem:[#allocation5 + $0x35c] sm:$0xf]
        %v767 = vld [vmem:[#allocation5 + $0x360] sm:$0xf]
        %v768 = vld [vmem:[#allocation5 + $0x364] sm:$0xf]
        %v769 = vld [vmem:[#allocation5 + $0x368] sm:$0xf]
        %v770 = vld [vmem:[#allocation5 + $0x36c] sm:$0xf]
        %v771 = vld [vmem:[#allocation5 + $0x370] sm:$0xf]
        %v772 = vld [vmem:[#allocation5 + $0x374] sm:$0xf]
        %v773 = vld [vmem:[#allocation5 + $0x378] sm:$0xf]
        %v774 = vld [vmem:[#allocation5 + $0x37c] sm:$0xf]
        %v775 = vld [vmem:[#allocation5 + $0x380] sm:$0xf]
        %v776 = vld [vmem:[#allocation5 + $0x384] sm:$0xf]
        %v777 = vld [vmem:[#allocation5 + $0x388] sm:$0xf]
        %v778 = vld [vmem:[#allocation5 + $0x38c] sm:$0xf]
        %v779 = vld [vmem:[#allocation5 + $0x390] sm:$0xf]
        %v780 = vld [vmem:[#allocation5 + $0x394] sm:$0xf]
        %v781 = vld [vmem:[#allocation5 + $0x398] sm:$0xf]
        %v782 = vld [vmem:[#allocation5 + $0x39c] sm:$0xf]
        %v783 = vld [vmem:[#allocation5 + $0x3a0] sm:$0xf]
        %v784 = vld [vmem:[#allocation5 + $0x3a4] sm:$0xf]
        %v785 = vld [vmem:[#allocation5 + $0x3a8] sm:$0xf]
        %v786 = vld [vmem:[#allocation5 + $0x3ac] sm:$0xf]
        %v787 = vld [vmem:[#allocation5 + $0x3b0] sm:$0xf]
        %v788 = vld [vmem:[#allocation5 + $0x3b4] sm:$0xf]
        %v789 = vld [vmem:[#allocation5 + $0x3b8] sm:$0xf]
        %v790 = vld [vmem:[#allocation5 + $0x3bc] sm:$0xf]
        %v791 = vld [vmem:[#allocation5 + $0x3c0] sm:$0xf]
        %v792 = vld [vmem:[#allocation5 + $0x3c4] sm:$0xf]
        %v793 = vld [vmem:[#allocation5 + $0x3c8] sm:$0xf]
        %v794 = vld [vmem:[#allocation5 + $0x3cc] sm:$0xf]
        %v795 = vld [vmem:[#allocation5 + $0x3d0] sm:$0xf]
        %v796 = vld [vmem:[#allocation5 + $0x3d4] sm:$0xf]
        %v797 = vld [vmem:[#allocation5 + $0x3d8] sm:$0xf]
        %v798 = vld [vmem:[#allocation5 + $0x3dc] sm:$0xf]
        %v799 = vld [vmem:[#allocation5 + $0x3e0] sm:$0xf]
        %v800 = vld [vmem:[#allocation5 + $0x3e4] sm:$0xf]
        %v801 = vld [vmem:[#allocation5 + $0x3e8] sm:$0xf]
        %v802 = vld [vmem:[#allocation5 + $0x3ec] sm:$0xf]
        %v803 = vld [vmem:[#allocation5 + $0x3f0] sm:$0xf]
        %v804 = vld [vmem:[#allocation5 + $0x3f4] sm:$0xf]
        %v805 = vld [vmem:[#allocation5 + $0x3f8] sm:$0xf]
        %v806 = vld [vmem:[#allocation5 + $0x3fc] sm:$0xf]
        %v807 = vld [vmem:[%s4] sm:$0x1]
        %v809 = vperm.slane %v807, 0
        %v1067 = vunpack.c.l.b16 %v551
        %v1068 = vunpack.c.l.b16 %v552
        %v1069 = vunpack.c.l.b16 %v553
        %v1070 = vunpack.c.l.b16 %v554
        %v1071 = vunpack.c.l.b16 %v555
        %v1072 = vunpack.c.l.b16 %v556
        %v1073 = vunpack.c.l.b16 %v557
        %v1074 = vunpack.c.l.b16 %v558
        %v1075 = vunpack.c.l.b16 %v559
        %v1076 = vunpack.c.l.b16 %v560
        %v1077 = vunpack.c.l.b16 %v561
        %v1078 = vunpack.c.l.b16 %v562
        %v1079 = vunpack.c.l.b16 %v563
        %v1080 = vunpack.c.l.b16 %v564
        %v1081 = vunpack.c.l.b16 %v565
        %v1082 = vunpack.c.l.b16 %v566
        %v1083 = vunpack.c.l.b16 %v567
        %v1084 = vunpack.c.l.b16 %v568
        %v1085 = vunpack.c.l.b16 %v569
        %v1086 = vunpack.c.l.b16 %v570
        %v1087 = vunpack.c.l.b16 %v571
        %v1088 = vunpack.c.l.b16 %v572
        %v1089 = vunpack.c.l.b16 %v573
        %v1090 = vunpack.c.l.b16 %v574
        %v1091 = vunpack.c.l.b16 %v575
        %v1092 = vunpack.c.l.b16 %v576
        %v1093 = vunpack.c.l.b16 %v577
        %v1094 = vunpack.c.l.b16 %v578
        %v1095 = vunpack.c.l.b16 %v579
        %v1096 = vunpack.c.l.b16 %v580
        %v1097 = vunpack.c.l.b16 %v581
        %v1098 = vunpack.c.l.b16 %v582
        %v1099 = vunpack.c.l.b16 %v583
        %v1100 = vunpack.c.l.b16 %v584
        %v1101 = vunpack.c.l.b16 %v585
        %v1102 = vunpack.c.l.b16 %v586
        %v1103 = vunpack.c.l.b16 %v587
        %v1104 = vunpack.c.l.b16 %v588
        %v1105 = vunpack.c.l.b16 %v589
        %v1106 = vunpack.c.l.b16 %v590
        %v1107 = vunpack.c.l.b16 %v591
        %v1108 = vunpack.c.l.b16 %v592
        %v1109 = vunpack.c.l.b16 %v593
        %v1110 = vunpack.c.l.b16 %v594
        %v1111 = vunpack.c.l.b16 %v595
        %v1112 = vunpack.c.l.b16 %v596
        %v1113 = vunpack.c.l.b16 %v597
        %v1114 = vunpack.c.l.b16 %v598
        %v1115 = vunpack.c.l.b16 %v599
        %v1116 = vunpack.c.l.b16 %v600
        %v1117 = vunpack.c.l.b16 %v601
        %v1118 = vunpack.c.l.b16 %v602
        %v1119 = vunpack.c.l.b16 %v603
        %v1120 = vunpack.c.l.b16 %v604
        %v1121 = vunpack.c.l.b16 %v605
        %v1122 = vunpack.c.l.b16 %v606
        %v1123 = vunpack.c.l.b16 %v607
        %v1124 = vunpack.c.l.b16 %v608
        %v1125 = vunpack.c.l.b16 %v609
        %v1126 = vunpack.c.l.b16 %v610
        %v1127 = vunpack.c.l.b16 %v611
        %v1128 = vunpack.c.l.b16 %v612
        %v1129 = vunpack.c.l.b16 %v613
        %v1130 = vunpack.c.l.b16 %v614
        %v1131 = vunpack.c.l.b16 %v615
        %v1132 = vunpack.c.l.b16 %v616
        %v1133 = vunpack.c.l.b16 %v617
        %v1134 = vunpack.c.l.b16 %v618
        %v1135 = vunpack.c.l.b16 %v619
        %v1136 = vunpack.c.l.b16 %v620
        %v1137 = vunpack.c.l.b16 %v621
        %v1138 = vunpack.c.l.b16 %v622
        %v1139 = vunpack.c.l.b16 %v623
        %v1140 = vunpack.c.l.b16 %v624
        %v1141 = vunpack.c.l.b16 %v625
        %v1142 = vunpack.c.l.b16 %v626
        %v1143 = vunpack.c.l.b16 %v627
        %v1144 = vunpack.c.l.b16 %v628
        %v1145 = vunpack.c.l.b16 %v629
        %v1146 = vunpack.c.l.b16 %v630
        %v1147 = vunpack.c.l.b16 %v631
        %v1148 = vunpack.c.l.b16 %v632
        %v1149 = vunpack.c.l.b16 %v633
        %v1150 = vunpack.c.l.b16 %v634
        %v1151 = vunpack.c.l.b16 %v635
        %v1152 = vunpack.c.l.b16 %v636
        %v1153 = vunpack.c.l.b16 %v637
        %v1154 = vunpack.c.l.b16 %v638
        %v1155 = vunpack.c.l.b16 %v639
        %v1156 = vunpack.c.l.b16 %v640
        %v1157 = vunpack.c.l.b16 %v641
        %v1158 = vunpack.c.l.b16 %v642
        %v1159 = vunpack.c.l.b16 %v643
        %v1160 = vunpack.c.l.b16 %v644
        %v1161 = vunpack.c.l.b16 %v645
        %v1162 = vunpack.c.l.b16 %v646
        %v1163 = vunpack.c.l.b16 %v647
        %v1164 = vunpack.c.l.b16 %v648
        %v1165 = vunpack.c.l.b16 %v649
        %v1166 = vunpack.c.l.b16 %v650
        %v1167 = vunpack.c.l.b16 %v651
        %v1168 = vunpack.c.l.b16 %v652
        %v1169 = vunpack.c.l.b16 %v653
        %v1170 = vunpack.c.l.b16 %v654
        %v1171 = vunpack.c.l.b16 %v655
        %v1172 = vunpack.c.l.b16 %v656
        %v1173 = vunpack.c.l.b16 %v657
        %v1174 = vunpack.c.l.b16 %v658
        %v1175 = vunpack.c.l.b16 %v659
        %v1176 = vunpack.c.l.b16 %v660
        %v1177 = vunpack.c.l.b16 %v661
        %v1178 = vunpack.c.l.b16 %v662
        %v1179 = vunpack.c.l.b16 %v663
        %v1180 = vunpack.c.l.b16 %v664
        %v1181 = vunpack.c.l.b16 %v665
        %v1182 = vunpack.c.l.b16 %v666
        %v1183 = vunpack.c.l.b16 %v667
        %v1184 = vunpack.c.l.b16 %v668
        %v1185 = vunpack.c.l.b16 %v669
        %v1186 = vunpack.c.l.b16 %v670
        %v1187 = vunpack.c.l.b16 %v671
        %v1188 = vunpack.c.l.b16 %v672
        %v1189 = vunpack.c.l.b16 %v673
        %v1190 = vunpack.c.l.b16 %v674
        %v1191 = vunpack.c.l.b16 %v675
        %v1192 = vunpack.c.l.b16 %v676
        %v1193 = vunpack.c.l.b16 %v677
        %v1194 = vunpack.c.l.b16 %v678
        %v1195 = vunpack.c.l.b16 %v679
        %v1196 = vunpack.c.l.b16 %v680
        %v1197 = vunpack.c.l.b16 %v681
        %v1198 = vunpack.c.l.b16 %v682
        %v1199 = vunpack.c.l.b16 %v683
        %v1200 = vunpack.c.l.b16 %v684
        %v1201 = vunpack.c.l.b16 %v685
        %v1202 = vunpack.c.l.b16 %v686
        %v1203 = vunpack.c.l.b16 %v687
        %v1204 = vunpack.c.l.b16 %v688
        %v1205 = vunpack.c.l.b16 %v689
        %v1206 = vunpack.c.l.b16 %v690
        %v1207 = vunpack.c.l.b16 %v691
        %v1208 = vunpack.c.l.b16 %v692
        %v1209 = vunpack.c.l.b16 %v693
        %v1210 = vunpack.c.l.b16 %v694
        %v1211 = vunpack.c.l.b16 %v695
        %v1212 = vunpack.c.l.b16 %v696
        %v1213 = vunpack.c.l.b16 %v697
        %v1214 = vunpack.c.l.b16 %v698
        %v1215 = vunpack.c.l.b16 %v699
        %v1216 = vunpack.c.l.b16 %v700
        %v1217 = vunpack.c.l.b16 %v701
        %v1218 = vunpack.c.l.b16 %v702
        %v1219 = vunpack.c.l.b16 %v703
        %v1220 = vunpack.c.l.b16 %v704
        %v1221 = vunpack.c.l.b16 %v705
        %v1222 = vunpack.c.l.b16 %v706
        %v1223 = vunpack.c.l.b16 %v707
        %v1224 = vunpack.c.l.b16 %v708
        %v1225 = vunpack.c.l.b16 %v709
        %v1226 = vunpack.c.l.b16 %v710
        %v1227 = vunpack.c.l.b16 %v711
        %v1228 = vunpack.c.l.b16 %v712
        %v1229 = vunpack.c.l.b16 %v713
        %v1230 = vunpack.c.l.b16 %v714
        %v1231 = vunpack.c.l.b16 %v715
        %v1232 = vunpack.c.l.b16 %v716
        %v1233 = vunpack.c.l.b16 %v717
        %v1234 = vunpack.c.l.b16 %v718
        %v1235 = vunpack.c.l.b16 %v719
        %v1236 = vunpack.c.l.b16 %v720
        %v1237 = vunpack.c.l.b16 %v721
        %v1238 = vunpack.c.l.b16 %v722
        %v1239 = vunpack.c.l.b16 %v723
        %v1240 = vunpack.c.l.b16 %v724
        %v1241 = vunpack.c.l.b16 %v725
        %v1242 = vunpack.c.l.b16 %v726
        %v1243 = vunpack.c.l.b16 %v727
        %v1244 = vunpack.c.l.b16 %v728
        %v1245 = vunpack.c.l.b16 %v729
        %v1246 = vunpack.c.l.b16 %v730
        %v1247 = vunpack.c.l.b16 %v731
        %v1248 = vunpack.c.l.b16 %v732
        %v1249 = vunpack.c.l.b16 %v733
        %v1250 = vunpack.c.l.b16 %v734
        %v1251 = vunpack.c.l.b16 %v735
        %v1252 = vunpack.c.l.b16 %v736
        %v1253 = vunpack.c.l.b16 %v737
        %v1254 = vunpack.c.l.b16 %v738
        %v1255 = vunpack.c.l.b16 %v739
        %v1256 = vunpack.c.l.b16 %v740
        %v1257 = vunpack.c.l.b16 %v741
        %v1258 = vunpack.c.l.b16 %v742
        %v1259 = vunpack.c.l.b16 %v743
        %v1260 = vunpack.c.l.b16 %v744
        %v1261 = vunpack.c.l.b16 %v745
        %v1262 = vunpack.c.l.b16 %v746
        %v1263 = vunpack.c.l.b16 %v747
        %v1264 = vunpack.c.l.b16 %v748
        %v1265 = vunpack.c.l.b16 %v749
        %v1266 = vunpack.c.l.b16 %v750
        %v1267 = vunpack.c.l.b16 %v751
        %v1268 = vunpack.c.l.b16 %v752
        %v1269 = vunpack.c.l.b16 %v753
        %v1270 = vunpack.c.l.b16 %v754
        %v1271 = vunpack.c.l.b16 %v755
        %v1272 = vunpack.c.l.b16 %v756
        %v1273 = vunpack.c.l.b16 %v757
        %v1274 = vunpack.c.l.b16 %v758
        %v1275 = vunpack.c.l.b16 %v759
        %v1276 = vunpack.c.l.b16 %v760
        %v1277 = vunpack.c.l.b16 %v761
        %v1278 = vunpack.c.l.b16 %v762
        %v1279 = vunpack.c.l.b16 %v763
        %v1280 = vunpack.c.l.b16 %v764
        %v1281 = vunpack.c.l.b16 %v765
        %v1282 = vunpack.c.l.b16 %v766
        %v1283 = vunpack.c.l.b16 %v767
        %v1284 = vunpack.c.l.b16 %v768
        %v1285 = vunpack.c.l.b16 %v769
        %v1286 = vunpack.c.l.b16 %v770
        %v1287 = vunpack.c.l.b16 %v771
        %v1288 = vunpack.c.l.b16 %v772
        %v1289 = vunpack.c.l.b16 %v773
        %v1290 = vunpack.c.l.b16 %v774
        %v1291 = vunpack.c.l.b16 %v775
        %v1292 = vunpack.c.l.b16 %v776
        %v1293 = vunpack.c.l.b16 %v777
        %v1294 = vunpack.c.l.b16 %v778
        %v1295 = vunpack.c.l.b16 %v779
        %v1296 = vunpack.c.l.b16 %v780
        %v1297 = vunpack.c.l.b16 %v781
        %v1298 = vunpack.c.l.b16 %v782
        %v1299 = vunpack.c.l.b16 %v783
        %v1300 = vunpack.c.l.b16 %v784
        %v1301 = vunpack.c.l.b16 %v785
        %v1302 = vunpack.c.l.b16 %v786
        %v1303 = vunpack.c.l.b16 %v787
        %v1304 = vunpack.c.l.b16 %v788
        %v1305 = vunpack.c.l.b16 %v789
        %v1306 = vunpack.c.l.b16 %v790
        %v1307 = vunpack.c.l.b16 %v791
        %v1308 = vunpack.c.l.b16 %v792
        %v1309 = vunpack.c.l.b16 %v793
        %v1310 = vunpack.c.l.b16 %v794
        %v1311 = vunpack.c.l.b16 %v795
        %v1312 = vunpack.c.l.b16 %v796
        %v1313 = vunpack.c.l.b16 %v797
        %v1314 = vunpack.c.l.b16 %v798
        %v1315 = vunpack.c.l.b16 %v799
        %v1316 = vunpack.c.l.b16 %v800
        %v1317 = vunpack.c.l.b16 %v801
        %v1318 = vunpack.c.l.b16 %v802
        %v1319 = vunpack.c.l.b16 %v803
        %v1320 = vunpack.c.l.b16 %v804
        %v1321 = vunpack.c.l.b16 %v805
        %v1322 = vunpack.c.l.b16 %v806
        %v1323 = vpack.c.b16 %v1068, %v1067
        %v1324 = vpack.c.b16 %v1070, %v1069
        %v1325 = vpack.c.b16 %v1072, %v1071
        %v1326 = vpack.c.b16 %v1074, %v1073
        %v1327 = vpack.c.b16 %v1076, %v1075
        %v1328 = vpack.c.b16 %v1078, %v1077
        %v1329 = vpack.c.b16 %v1080, %v1079
        %v1330 = vpack.c.b16 %v1082, %v1081
        %v1331 = vpack.c.b16 %v1084, %v1083
        %v1332 = vpack.c.b16 %v1086, %v1085
        %v1333 = vpack.c.b16 %v1088, %v1087
        %v1334 = vpack.c.b16 %v1090, %v1089
        %v1335 = vpack.c.b16 %v1092, %v1091
        %v1336 = vpack.c.b16 %v1094, %v1093
        %v1337 = vpack.c.b16 %v1096, %v1095
        %v1338 = vpack.c.b16 %v1098, %v1097
        %v1339 = vpack.c.b16 %v1100, %v1099
        %v1340 = vpack.c.b16 %v1102, %v1101
        %v1341 = vpack.c.b16 %v1104, %v1103
        %v1342 = vpack.c.b16 %v1106, %v1105
        %v1343 = vpack.c.b16 %v1108, %v1107
        %v1344 = vpack.c.b16 %v1110, %v1109
        %v1345 = vpack.c.b16 %v1112, %v1111
        %v1346 = vpack.c.b16 %v1114, %v1113
        %v1347 = vpack.c.b16 %v1116, %v1115
        %v1348 = vpack.c.b16 %v1118, %v1117
        %v1349 = vpack.c.b16 %v1120, %v1119
        %v1350 = vpack.c.b16 %v1122, %v1121
        %v1351 = vpack.c.b16 %v1124, %v1123
        %v1352 = vpack.c.b16 %v1126, %v1125
        %v1353 = vpack.c.b16 %v1128, %v1127
        %v1354 = vpack.c.b16 %v1130, %v1129
        %v1355 = vpack.c.b16 %v1132, %v1131
        %v1356 = vpack.c.b16 %v1134, %v1133
        %v1357 = vpack.c.b16 %v1136, %v1135
        %v1358 = vpack.c.b16 %v1138, %v1137
        %v1359 = vpack.c.b16 %v1140, %v1139
        %v1360 = vpack.c.b16 %v1142, %v1141
        %v1361 = vpack.c.b16 %v1144, %v1143
        %v1362 = vpack.c.b16 %v1146, %v1145
        %v1363 = vpack.c.b16 %v1148, %v1147
        %v1364 = vpack.c.b16 %v1150, %v1149
        %v1365 = vpack.c.b16 %v1152, %v1151
        %v1366 = vpack.c.b16 %v1154, %v1153
        %v1367 = vpack.c.b16 %v1156, %v1155
        %v1368 = vpack.c.b16 %v1158, %v1157
        %v1369 = vpack.c.b16 %v1160, %v1159
        %v1370 = vpack.c.b16 %v1162, %v1161
        %v1371 = vpack.c.b16 %v1164, %v1163
        %v1372 = vpack.c.b16 %v1166, %v1165
        %v1373 = vpack.c.b16 %v1168, %v1167
        %v1374 = vpack.c.b16 %v1170, %v1169
        %v1375 = vpack.c.b16 %v1172, %v1171
        %v1376 = vpack.c.b16 %v1174, %v1173
        %v1377 = vpack.c.b16 %v1176, %v1175
        %v1378 = vpack.c.b16 %v1178, %v1177
        %v1379 = vpack.c.b16 %v1180, %v1179
        %v1380 = vpack.c.b16 %v1182, %v1181
        %v1381 = vpack.c.b16 %v1184, %v1183
        %v1382 = vpack.c.b16 %v1186, %v1185
        %v1383 = vpack.c.b16 %v1188, %v1187
        %v1384 = vpack.c.b16 %v1190, %v1189
        %v1385 = vpack.c.b16 %v1192, %v1191
        %v1386 = vpack.c.b16 %v1194, %v1193
        %v1387 = vpack.c.b16 %v1196, %v1195
        %v1388 = vpack.c.b16 %v1198, %v1197
        %v1389 = vpack.c.b16 %v1200, %v1199
        %v1390 = vpack.c.b16 %v1202, %v1201
        %v1391 = vpack.c.b16 %v1204, %v1203
        %v1392 = vpack.c.b16 %v1206, %v1205
        %v1393 = vpack.c.b16 %v1208, %v1207
        %v1394 = vpack.c.b16 %v1210, %v1209
        %v1395 = vpack.c.b16 %v1212, %v1211
        %v1396 = vpack.c.b16 %v1214, %v1213
        %v1397 = vpack.c.b16 %v1216, %v1215
        %v1398 = vpack.c.b16 %v1218, %v1217
        %v1399 = vpack.c.b16 %v1220, %v1219
        %v1400 = vpack.c.b16 %v1222, %v1221
        %v1401 = vpack.c.b16 %v1224, %v1223
        %v1402 = vpack.c.b16 %v1226, %v1225
        %v1403 = vpack.c.b16 %v1228, %v1227
        %v1404 = vpack.c.b16 %v1230, %v1229
        %v1405 = vpack.c.b16 %v1232, %v1231
        %v1406 = vpack.c.b16 %v1234, %v1233
        %v1407 = vpack.c.b16 %v1236, %v1235
        %v1408 = vpack.c.b16 %v1238, %v1237
        %v1409 = vpack.c.b16 %v1240, %v1239
        %v1410 = vpack.c.b16 %v1242, %v1241
        %v1411 = vpack.c.b16 %v1244, %v1243
        %v1412 = vpack.c.b16 %v1246, %v1245
        %v1413 = vpack.c.b16 %v1248, %v1247
        %v1414 = vpack.c.b16 %v1250, %v1249
        %v1415 = vpack.c.b16 %v1252, %v1251
        %v1416 = vpack.c.b16 %v1254, %v1253
        %v1417 = vpack.c.b16 %v1256, %v1255
        %v1418 = vpack.c.b16 %v1258, %v1257
        %v1419 = vpack.c.b16 %v1260, %v1259
        %v1420 = vpack.c.b16 %v1262, %v1261
        %v1421 = vpack.c.b16 %v1264, %v1263
        %v1422 = vpack.c.b16 %v1266, %v1265
        %v1423 = vpack.c.b16 %v1268, %v1267
        %v1424 = vpack.c.b16 %v1270, %v1269
        %v1425 = vpack.c.b16 %v1272, %v1271
        %v1426 = vpack.c.b16 %v1274, %v1273
        %v1427 = vpack.c.b16 %v1276, %v1275
        %v1428 = vpack.c.b16 %v1278, %v1277
        %v1429 = vpack.c.b16 %v1280, %v1279
        %v1430 = vpack.c.b16 %v1282, %v1281
        %v1431 = vpack.c.b16 %v1284, %v1283
        %v1432 = vpack.c.b16 %v1286, %v1285
        %v1433 = vpack.c.b16 %v1288, %v1287
        %v1434 = vpack.c.b16 %v1290, %v1289
        %v1435 = vpack.c.b16 %v1292, %v1291
        %v1436 = vpack.c.b16 %v1294, %v1293
        %v1437 = vpack.c.b16 %v1296, %v1295
        %v1438 = vpack.c.b16 %v1298, %v1297
        %v1439 = vpack.c.b16 %v1300, %v1299
        %v1440 = vpack.c.b16 %v1302, %v1301
        %v1441 = vpack.c.b16 %v1304, %v1303
        %v1442 = vpack.c.b16 %v1306, %v1305
        %v1443 = vpack.c.b16 %v1308, %v1307
        %v1444 = vpack.c.b16 %v1310, %v1309
        %v1445 = vpack.c.b16 %v1312, %v1311
        %v1446 = vpack.c.b16 %v1314, %v1313
        %v1447 = vpack.c.b16 %v1316, %v1315
        %v1448 = vpack.c.b16 %v1318, %v1317
        %v1449 = vpack.c.b16 %v1320, %v1319
        %v1450 = vpack.c.b16 %v1322, %v1321
        %1579 = vmatpush.bf16.msra.mxu0 %v1330
        %1580 = vmatpush.bf16.msra.mxu0 %v1329
        %1581 = vmatpush.bf16.msra.mxu0 %v1328
        %1582 = vmatpush.bf16.msra.mxu0 %v1327
        %1583 = vmatpush.bf16.msra.mxu0 %v1326
        %1584 = vmatpush.bf16.msra.mxu0 %v1325
        %1585 = vmatpush.bf16.msra.mxu0 %v1324
        %1586 = vmatpush.bf16.msra.mxu0 %v1323
        %1587 = vmatmul.bf16.gmra.mxu0 %v535
        %v1588 = vpop.f32.mrf.mxu0
        %v1589 = vadd.f32 %v809, %v1588
        %v1590 = vpop.f32.mrf.mxu0
        %v1591 = vadd.f32 %v809, %v1590
        %1592 = vdwg.mxu0
        %1593 = vmatpush.bf16.msra.mxu0 %v1338
        %1594 = vmatpush.bf16.msra.mxu0 %v1337
        %1595 = vmatpush.bf16.msra.mxu0 %v1336
        %1596 = vmatpush.bf16.msra.mxu0 %v1335
        %1597 = vmatpush.bf16.msra.mxu0 %v1334
        %1598 = vmatpush.bf16.msra.mxu0 %v1333
        %1599 = vmatpush.bf16.msra.mxu0 %v1332
        %1600 = vmatpush.bf16.msra.mxu0 %v1331
        %1601 = vmatmul.bf16.gmra.mxu0 %v536
        %v1602 = vpop.f32.mrf.mxu0
        %v1603 = vadd.f32 %v1589, %v1602
        %v1604 = vpop.f32.mrf.mxu0
        %v1605 = vadd.f32 %v1591, %v1604
        %1606 = vdwg.mxu0
        %1607 = vmatpush.bf16.msra.mxu0 %v1346
        %1608 = vmatpush.bf16.msra.mxu0 %v1345
        %1609 = vmatpush.bf16.msra.mxu0 %v1344
        %1610 = vmatpush.bf16.msra.mxu0 %v1343
        %1611 = vmatpush.bf16.msra.mxu0 %v1342
        %1612 = vmatpush.bf16.msra.mxu0 %v1341
        %1613 = vmatpush.bf16.msra.mxu0 %v1340
        %1614 = vmatpush.bf16.msra.mxu0 %v1339
        %1615 = vmatmul.bf16.gmra.mxu0 %v537
        %v1616 = vpop.f32.mrf.mxu0
        %v1617 = vadd.f32 %v1603, %v1616
        %v1618 = vpop.f32.mrf.mxu0
        %v1619 = vadd.f32 %v1605, %v1618
        %1620 = vdwg.mxu0
        %1621 = vmatpush.bf16.msra.mxu0 %v1354
        %1622 = vmatpush.bf16.msra.mxu0 %v1353
        %1623 = vmatpush.bf16.msra.mxu0 %v1352
        %1624 = vmatpush.bf16.msra.mxu0 %v1351
        %1625 = vmatpush.bf16.msra.mxu0 %v1350
        %1626 = vmatpush.bf16.msra.mxu0 %v1349
        %1627 = vmatpush.bf16.msra.mxu0 %v1348
        %1628 = vmatpush.bf16.msra.mxu0 %v1347
        %1629 = vmatmul.bf16.gmra.mxu0 %v538
        %v1630 = vpop.f32.mrf.mxu0
        %v1631 = vadd.f32 %v1617, %v1630
        %v1632 = vpop.f32.mrf.mxu0
        %v1633 = vadd.f32 %v1619, %v1632
        %1634 = vdwg.mxu0
        %1635 = vmatpush.bf16.msra.mxu0 %v1362
        %1636 = vmatpush.bf16.msra.mxu0 %v1361
        %1637 = vmatpush.bf16.msra.mxu0 %v1360
        %1638 = vmatpush.bf16.msra.mxu0 %v1359
        %1639 = vmatpush.bf16.msra.mxu0 %v1358
        %1640 = vmatpush.bf16.msra.mxu0 %v1357
        %1641 = vmatpush.bf16.msra.mxu0 %v1356
        %1642 = vmatpush.bf16.msra.mxu0 %v1355
        %1643 = vmatmul.bf16.gmra.mxu0 %v539
        %v1644 = vpop.f32.mrf.mxu0
        %v1645 = vadd.f32 %v1631, %v1644
        %v1646 = vpop.f32.mrf.mxu0
        %v1647 = vadd.f32 %v1633, %v1646
        %1648 = vdwg.mxu0
        %1649 = vmatpush.bf16.msra.mxu0 %v1370
        %1650 = vmatpush.bf16.msra.mxu0 %v1369
        %1651 = vmatpush.bf16.msra.mxu0 %v1368
        %1652 = vmatpush.bf16.msra.mxu0 %v1367
        %1653 = vmatpush.bf16.msra.mxu0 %v1366
        %1654 = vmatpush.bf16.msra.mxu0 %v1365
        %1655 = vmatpush.bf16.msra.mxu0 %v1364
        %1656 = vmatpush.bf16.msra.mxu0 %v1363
        %1657 = vmatmul.bf16.gmra.mxu0 %v540
        %v1658 = vpop.f32.mrf.mxu0
        %v1659 = vadd.f32 %v1645, %v1658
        %v1660 = vpop.f32.mrf.mxu0
        %v1661 = vadd.f32 %v1647, %v1660
        %1662 = vdwg.mxu0
        %1663 = vmatpush.bf16.msra.mxu0 %v1378
        %1664 = vmatpush.bf16.msra.mxu0 %v1377
        %1665 = vmatpush.bf16.msra.mxu0 %v1376
        %1666 = vmatpush.bf16.msra.mxu0 %v1375
        %1667 = vmatpush.bf16.msra.mxu0 %v1374
        %1668 = vmatpush.bf16.msra.mxu0 %v1373
        %1669 = vmatpush.bf16.msra.mxu0 %v1372
        %1670 = vmatpush.bf16.msra.mxu0 %v1371
        %1671 = vmatmul.bf16.gmra.mxu0 %v541
        %v1672 = vpop.f32.mrf.mxu0
        %v1673 = vadd.f32 %v1659, %v1672
        %v1674 = vpop.f32.mrf.mxu0
        %v1675 = vadd.f32 %v1661, %v1674
        %1676 = vdwg.mxu0
        %1677 = vmatpush.bf16.msra.mxu0 %v1386
        %1678 = vmatpush.bf16.msra.mxu0 %v1385
        %1679 = vmatpush.bf16.msra.mxu0 %v1384
        %1680 = vmatpush.bf16.msra.mxu0 %v1383
        %1681 = vmatpush.bf16.msra.mxu0 %v1382
        %1682 = vmatpush.bf16.msra.mxu0 %v1381
        %1683 = vmatpush.bf16.msra.mxu0 %v1380
        %1684 = vmatpush.bf16.msra.mxu0 %v1379
        %1685 = vmatmul.bf16.gmra.mxu0 %v542
        %v1686 = vpop.f32.mrf.mxu0
        %v1687 = vadd.f32 %v1673, %v1686
        %v1688 = vpop.f32.mrf.mxu0
        %v1689 = vadd.f32 %v1675, %v1688
        %1690 = vdwg.mxu0
        %1691 = vmatpush.bf16.msra.mxu0 %v1394
        %1692 = vmatpush.bf16.msra.mxu0 %v1393
        %1693 = vmatpush.bf16.msra.mxu0 %v1392
        %1694 = vmatpush.bf16.msra.mxu0 %v1391
        %1695 = vmatpush.bf16.msra.mxu0 %v1390
        %1696 = vmatpush.bf16.msra.mxu0 %v1389
        %1697 = vmatpush.bf16.msra.mxu0 %v1388
        %1698 = vmatpush.bf16.msra.mxu0 %v1387
        %1699 = vmatmul.bf16.gmra.mxu0 %v543
        %v1700 = vpop.f32.mrf.mxu0
        %v1701 = vadd.f32 %v1687, %v1700
        %v1702 = vpop.f32.mrf.mxu0
        %v1703 = vadd.f32 %v1689, %v1702
        %1704 = vdwg.mxu0
        %1705 = vmatpush.bf16.msra.mxu0 %v1402
        %1706 = vmatpush.bf16.msra.mxu0 %v1401
        %1707 = vmatpush.bf16.msra.mxu0 %v1400
        %1708 = vmatpush.bf16.msra.mxu0 %v1399
        %1709 = vmatpush.bf16.msra.mxu0 %v1398
        %1710 = vmatpush.bf16.msra.mxu0 %v1397
        %1711 = vmatpush.bf16.msra.mxu0 %v1396
        %1712 = vmatpush.bf16.msra.mxu0 %v1395
        %1713 = vmatmul.bf16.gmra.mxu0 %v544
        %v1714 = vpop.f32.mrf.mxu0
        %v1715 = vadd.f32 %v1701, %v1714
        %v1716 = vpop.f32.mrf.mxu0
        %v1717 = vadd.f32 %v1703, %v1716
        %1718 = vdwg.mxu0
        %1719 = vmatpush.bf16.msra.mxu0 %v1410
        %1720 = vmatpush.bf16.msra.mxu0 %v1409
        %1721 = vmatpush.bf16.msra.mxu0 %v1408
        %1722 = vmatpush.bf16.msra.mxu0 %v1407
        %1723 = vmatpush.bf16.msra.mxu0 %v1406
        %1724 = vmatpush.bf16.msra.mxu0 %v1405
        %1725 = vmatpush.bf16.msra.mxu0 %v1404
        %1726 = vmatpush.bf16.msra.mxu0 %v1403
        %1727 = vmatmul.bf16.gmra.mxu0 %v545
        %v1728 = vpop.f32.mrf.mxu0
        %v1729 = vadd.f32 %v1715, %v1728
        %v1730 = vpop.f32.mrf.mxu0
        %v1731 = vadd.f32 %v1717, %v1730
        %1732 = vdwg.mxu0
        %1733 = vmatpush.bf16.msra.mxu0 %v1418
        %1734 = vmatpush.bf16.msra.mxu0 %v1417
        %1735 = vmatpush.bf16.msra.mxu0 %v1416
        %1736 = vmatpush.bf16.msra.mxu0 %v1415
        %1737 = vmatpush.bf16.msra.mxu0 %v1414
        %1738 = vmatpush.bf16.msra.mxu0 %v1413
        %1739 = vmatpush.bf16.msra.mxu0 %v1412
        %1740 = vmatpush.bf16.msra.mxu0 %v1411
        %1741 = vmatmul.bf16.gmra.mxu0 %v546
        %v1742 = vpop.f32.mrf.mxu0
        %v1743 = vadd.f32 %v1729, %v1742
        %v1744 = vpop.f32.mrf.mxu0
        %v1745 = vadd.f32 %v1731, %v1744
        %1746 = vdwg.mxu0
        %1747 = vmatpush.bf16.msra.mxu0 %v1426
        %1748 = vmatpush.bf16.msra.mxu0 %v1425
        %1749 = vmatpush.bf16.msra.mxu0 %v1424
        %1750 = vmatpush.bf16.msra.mxu0 %v1423
        %1751 = vmatpush.bf16.msra.mxu0 %v1422
        %1752 = vmatpush.bf16.msra.mxu0 %v1421
        %1753 = vmatpush.bf16.msra.mxu0 %v1420
        %1754 = vmatpush.bf16.msra.mxu0 %v1419
        %1755 = vmatmul.bf16.gmra.mxu0 %v547
        %v1756 = vpop.f32.mrf.mxu0
        %v1757 = vadd.f32 %v1743, %v1756
        %v1758 = vpop.f32.mrf.mxu0
        %v1759 = vadd.f32 %v1745, %v1758
        %1760 = vdwg.mxu0
        %1761 = vmatpush.bf16.msra.mxu0 %v1434
        %1762 = vmatpush.bf16.msra.mxu0 %v1433
        %1763 = vmatpush.bf16.msra.mxu0 %v1432
        %1764 = vmatpush.bf16.msra.mxu0 %v1431
        %1765 = vmatpush.bf16.msra.mxu0 %v1430
        %1766 = vmatpush.bf16.msra.mxu0 %v1429
        %1767 = vmatpush.bf16.msra.mxu0 %v1428
        %1768 = vmatpush.bf16.msra.mxu0 %v1427
        %1769 = vmatmul.bf16.gmra.mxu0 %v548
        %v1770 = vpop.f32.mrf.mxu0
        %v1771 = vadd.f32 %v1757, %v1770
        %v1772 = vpop.f32.mrf.mxu0
        %v1773 = vadd.f32 %v1759, %v1772
        %1774 = vdwg.mxu0
        %1775 = vmatpush.bf16.msra.mxu0 %v1442
        %1776 = vmatpush.bf16.msra.mxu0 %v1441
        %1777 = vmatpush.bf16.msra.mxu0 %v1440
        %1778 = vmatpush.bf16.msra.mxu0 %v1439
        %1779 = vmatpush.bf16.msra.mxu0 %v1438
        %1780 = vmatpush.bf16.msra.mxu0 %v1437
        %1781 = vmatpush.bf16.msra.mxu0 %v1436
        %1782 = vmatpush.bf16.msra.mxu0 %v1435
        %1783 = vmatmul.bf16.gmra.mxu0 %v549
        %v1784 = vpop.f32.mrf.mxu0
        %v1785 = vadd.f32 %v1771, %v1784
        %v1786 = vpop.f32.mrf.mxu0
        %v1787 = vadd.f32 %v1773, %v1786
        %1788 = vdwg.mxu0
        %1789 = vmatpush.bf16.msra.mxu0 %v1450
        %1790 = vmatpush.bf16.msra.mxu0 %v1449
        %1791 = vmatpush.bf16.msra.mxu0 %v1448
        %1792 = vmatpush.bf16.msra.mxu0 %v1447
        %1793 = vmatpush.bf16.msra.mxu0 %v1446
        %1794 = vmatpush.bf16.msra.mxu0 %v1445
        %1795 = vmatpush.bf16.msra.mxu0 %v1444
        %1796 = vmatpush.bf16.msra.mxu0 %v1443
        %1797 = vmatmul.bf16.gmra.mxu0 %v550
        %v1798 = vpop.f32.mrf.mxu0
        %v1799 = vadd.f32 %v1785, %v1798
        %v1800 = vpop.f32.mrf.mxu0
        %v1801 = vadd.f32 %v1787, %v1800
        %1802 = vdwg.mxu0
        %v1803 = vld [vmem:[%s5] sm:$0x1]
        %v1804 = vld [vmem:[%s6] sm:$0x1]
        %1805 = vadd.xlane.f32.xlu0 %v1799
        %v1806 = vpop.xlane.xlu0 %1805
        %1807 = vadd.xlane.f32.xlu0 %v1801
        %v1808 = vpop.xlane.xlu0 %1807
        %v1809 = vrcp.pop 128.0
        %v1810 = vmul.f32 128.0, %v1809
        %v1811 = vsub.f32 1.0, %v1810
        %v1812 = vmul.f32 %v1809, %v1811
        %v1813 = vadd.f32 %v1809, %v1812
        %vm1814 = vweird.f32 %v1809
        %v1815 = vsel %vm1814, %v1809, %v1813
        %v1816 = vmul.f32 %v1806, %v1815
        %v1817 = vmul.f32 %v1808, %v1815
        %v1818 = vsub.f32 %v1799, %v1816
        %v1819 = vsub.f32 %v1801, %v1817
        %v1820 = vmul.f32 %v1818, %v1818
        %v1821 = vmul.f32 %v1819, %v1819
        %1822 = vadd.xlane.f32.xlu0 %v1820
        %v1823 = vpop.xlane.xlu0 %1822
        %1824 = vadd.xlane.f32.xlu0 %v1821
        %v1825 = vpop.xlane.xlu0 %1824
        %v1826 = vmul.f32 %v1823, %v1815
        %v1827 = vmul.f32 %v1825, %v1815
        %v1828 = vadd.f32 %v1826, 1e-05
        %v1829 = vadd.f32 %v1827, 1e-05
        %v1830 = vrsqrt.pop %v1828
        %v1831 = vmul.f32 %v1830, %v1828
        %v1832 = vmul.f32 %v1831, %v1830
        %v1833 = vmul.f32 0.5, %v1832
        %v1834 = vsub.f32 1.5, %v1833
        %v1835 = vmul.f32 %v1830, %v1834
        %vm1836 = vweird.f32 %v1828
        %vm1837 = vweird.f32 %v1830
        %vm1838 = vmor %vm1836, %vm1837
        %v1839 = vsel %vm1838, %v1830, %v1835
        %v1840 = vrsqrt.pop %v1829
        %v1841 = vmul.f32 %v1840, %v1829
        %v1842 = vmul.f32 %v1841, %v1840
        %v1843 = vmul.f32 0.5, %v1842
        %v1844 = vsub.f32 1.5, %v1843
        %v1845 = vmul.f32 %v1840, %v1844
        %vm1846 = vweird.f32 %v1829
        %vm1847 = vweird.f32 %v1840
        %vm1848 = vmor %vm1846, %vm1847
        %v1849 = vsel %vm1848, %v1840, %v1845
        %v1850 = vmul.f32 %v1818, %v1839
        %v1851 = vmul.f32 %v1819, %v1849
        %v1853 = vperm.slane %v1803, 0
        %v1855 = vmul.f32 %v1850, %v1853
        %v1856 = vmul.f32 %v1851, %v1853
        %v1858 = vperm.slane %v1804, 0
        %v1860 = vadd.f32 %v1855, %v1858
        %v1861 = vadd.f32 %v1856, %v1858
        %v1862 = vld [vmem:[%s494] sm:$0xff]
        %v1863 = vld [vmem:[%s494 + $0x8] sm:$0xff]
        %v1864 = vld [vmem:[%s7] sm:$0x1f]
        %v1865 = vld [vmem:[%s8] sm:$0x1]
        %v1867 = vperm.slane %v1865, 0
        %vm1869 = vcmask 39936
        %v1871 = vsel %vm1869, %v1862, 0
        %v1874 = vsel %vm1869, %v1863, 0
        %vm1876 = vcmask 1044480
        %v1878 = vsel %vm1876, %v1864, 0
        %1880 = vmatpush.msra.mxu0 0.0
        %1881 = vmatpush.msra.mxu0 0.0
        %1882 = vmatpush.msra.mxu0 0.0
        %1883 = vmatpush.msra.mxu0 0.0
        %1884 = vmatpush.msra.mxu0 0.0
        %1885 = vmatpush.msra.mxu0 0.0
        %1886 = vmatpush.msra.mxu0 0.0
        %1887 = vmatpush.msra.mxu0 0.0
        %1888 = vmatpush.msra.mxu0 0.0
        %1889 = vmatpush.msra.mxu0 0.0
        %1890 = vmatpush.msra.mxu0 0.0
        %1891 = vmatpush.msra.mxu0 0.0
        %1892 = vmatpush.msra.mxu0 0.0
        %1893 = vmatpush.msra.mxu0 0.0
        %1894 = vmatpush.msra.mxu0 0.0
        %1895 = vmatpush.msra.mxu0 %v1878
        %1896 = vmatmul.f32.gmra.mxu0 %v1871
        %v1897 = vpop.f32.mrf.mxu0
        %v1898 = vadd.f32 %v1867, %v1897
        %1899 = vmatmul.f32.gmra.mxu0 %v1874
        %v1900 = vpop.f32.mrf.mxu0
        %v1901 = vadd.f32 %v1867, %v1900
        %1902 = vdwg.mxu0
        %v1903 = vld [vmem:[%s9] sm:$0x1]
        %v1904 = vld [vmem:[%s10] sm:$0x1]
        %1905 = vadd.xlane.f32.xlu0 %v1898
        %v1906 = vpop.xlane.xlu0 %1905
        %1907 = vadd.xlane.f32.xlu0 %v1901
        %v1908 = vpop.xlane.xlu0 %1907
        %v1909 = vmul.f32 %v1906, %v1815
        %v1910 = vmul.f32 %v1908, %v1815
        %v1911 = vsub.f32 %v1898, %v1909
        %v1912 = vsub.f32 %v1901, %v1910
        %v1913 = vmul.f32 %v1911, %v1911
        %v1914 = vmul.f32 %v1912, %v1912
        %1915 = vadd.xlane.f32.xlu0 %v1913
        %v1916 = vpop.xlane.xlu0 %1915
        %1917 = vadd.xlane.f32.xlu0 %v1914
        %v1918 = vpop.xlane.xlu0 %1917
        %v1919 = vmul.f32 %v1916, %v1815
        %v1920 = vmul.f32 %v1918, %v1815
        %v1921 = vadd.f32 %v1919, 1e-05
        %v1922 = vadd.f32 %v1920, 1e-05
        %v1923 = vrsqrt.pop %v1921
        %v1924 = vmul.f32 %v1923, %v1921
        %v1925 = vmul.f32 %v1924, %v1923
        %v1926 = vmul.f32 0.5, %v1925
        %v1927 = vsub.f32 1.5, %v1926
        %v1928 = vmul.f32 %v1923, %v1927
        %vm1929 = vweird.f32 %v1921
        %vm1930 = vweird.f32 %v1923
        %vm1931 = vmor %vm1929, %vm1930
        %v1932 = vsel %vm1931, %v1923, %v1928
        %v1933 = vrsqrt.pop %v1922
        %v1934 = vmul.f32 %v1933, %v1922
        %v1935 = vmul.f32 %v1934, %v1933
        %v1936 = vmul.f32 0.5, %v1935
        %v1937 = vsub.f32 1.5, %v1936
        %v1938 = vmul.f32 %v1933, %v1937
        %vm1939 = vweird.f32 %v1922
        %vm1940 = vweird.f32 %v1933
        %vm1941 = vmor %vm1939, %vm1940
        %v1942 = vsel %vm1941, %v1933, %v1938
        %v1943 = vmul.f32 %v1911, %v1932
        %v1944 = vmul.f32 %v1912, %v1942
        %v1946 = vperm.slane %v1903, 0
        %v1948 = vmul.f32 %v1943, %v1946
        %v1949 = vmul.f32 %v1944, %v1946
        %v1951 = vperm.slane %v1904, 0
        %v1953 = vadd.f32 %v1948, %v1951
        %v1954 = vadd.f32 %v1949, %v1951
        %v1955 = vadd.f32 %v1860, %v1953
        %v1956 = vadd.f32 %v1861, %v1954
        %v1957 = vld [vmem:[%s500] sm:$0xff]
        %v1958 = vld [vmem:[%s500 + $0x8] sm:$0xff]
        %v1959 = vadd.f32 %v1955, %v1957
        %v1960 = vadd.f32 %v1956, %v1958
        %1961 = vst [vmem:[%s484] sm:$0xff] %v1959
        %1962 = vst [vmem:[%s484 + $0x8] sm:$0xff] %v1960
        %s1963 = sand.u32 %s301, 1
        %s1964 = scalar_lea.sflag [#allocation4], %s1963
        %s1965 = sand.u32 %s301, 1
        %s1966 = smul.addr %s1965, 16
        %s1967 = scalar_lea.vmem [#allocation7], %s1966
        // Predicated region
        $region73: #{tpu_custom_call.1} parent=63 // pred_check
          %p1968 = pneg %p311
        $region74: #{tpu_custom_call.1} parent=63 // pred_check_branch
          %1970 = sbr.rel (%p1968) target = $region76
        $region75: #{tpu_custom_call.1} parent=63 // pred_region
          %s1971 = smul.u32 2, %s34
          %1973 = vsyncadd %s1964, 0
          %s1974 = smul.addr %s33, 2
          %s1975 = sadd.s32 %s1971, %s1974
          %s1976 = smul.addr %s1975, 8
          %s1977 = scalar_lea.hbm %s11, %s1976
          %s1978 = sshll.u32 %s1967, 4
          %s1979 = int_to_ptr.vmem [resolvable:$true] %s1978
          %s1980 = sshll.u32 %s1977, 4
          %s1981 = int_to_ptr.hbm [resolvable:$true] %s1980
          %1986 = dma.vmem_to_hbm [thread:$0]  %s1979, 256, %s1981, %s1964, 128, 128, 8
        $region76: #{tpu_custom_call.1} parent=63 // pred_fallthru
          _
      $region64: #{tpu_custom_call.1} parent=5 // pred_fallthru
        _
      %p1987 = scmp.le.s32.totalorder 2, %s24
      // Predicated region
      $region77: #{tpu_custom_call.1} parent=5 // pred_check
        %p1988 = pneg %p1987
      $region78: #{tpu_custom_call.1} parent=5 // pred_check_branch
        %1990 = sbr.rel (%p1988) target = $region80
      $region79: #{tpu_custom_call.1} parent=5 // pred_region
        %s1991 = ssub.s32 %s24, 2
        // Predicated region
        $region81: #{tpu_custom_call.1} parent=79 // pred_check
          %p1992 = pneg %p317
        $region82: #{tpu_custom_call.1} parent=79 // pred_check_branch
          %1994 = sbr.rel (%p1992) target = $region84
        $region83: #{tpu_custom_call.1} parent=79 // pred_region
          %s1995 = sand.u32 %s302, 1
          %s1996 = scalar_lea.sflag [#allocation4], %s1995
          %s1997 = sand.u32 %s302, 1
          %s1998 = smul.addr %s1997, 16
          %s1999 = scalar_lea.vmem [#allocation7], %s1998
          %2001 = dma.done %s1996, 256
        $region84: #{tpu_custom_call.1} parent=79 // pred_fallthru
          _
      $region80: #{tpu_custom_call.1} parent=5 // pred_fallthru
        _
    $region6: #{tpu_custom_call.1} parent=1 // loop_footer
      %s28 = sadd.s32 1, %s24
    $region7: #{tpu_custom_call.1} parent=1 // loop_footer_branch
      %23 = sbr.rel target = $region3
    $region8: #{tpu_custom_call.1} parent=1 // loop_exit
      _
    %2002 = vsyncpa [#allocation3], 1
    %s2003 = scalar_lea.sflag [#allocation3], 1
    %2004 = vsyncpa %s2003, 1
    %2005 = vsyncpa [#allocation6], 1
    %2006 = vsyncpa [#allocation4], 1
    %s2007 = scalar_lea.sflag [#allocation4], 1
    %2008 = vsyncpa %s2007, 1

</llo_original>
